<compile_context>
chip_gen: v5e
topology: v5e:2x2
jax: 0.10.0
libtpu: 0.0.40
codegen_flags: <defaults>
</compile_context>

<pallas_src>
import functools

import jax
import jax.numpy as jnp
from jax import lax
from jax.experimental import pallas as pl
from jax.experimental.pallas import tpu as pltpu

L = 1024   # self.L
D = 128    # self.D
K = 1      # self.K (kernel assumes K == 1, as in the module)

_LANE = 128
_MAX_BLOCK_B = 128   # cap: block-diagonal mask work scales with block_b * rows


def _round_up(v, m):
    return (v + m - 1) // m * m


def abmil_kernel(x_ref, w1t_ref, b1_ref, w2r_ref, b2_ref, wh_ref, bh_ref,
                 out_ref, m_scr, l_scr, acc_scr,
                 *, n_total, block_n, mask_tail):
    n_idx = pl.program_id(1)

    @pl.when(n_idx == 0)
    def _init():
        m_scr[...] = jnp.full(m_scr.shape, -jnp.inf, m_scr.dtype)
        l_scr[...] = jnp.zeros(l_scr.shape, l_scr.dtype)
        acc_scr[...] = jnp.zeros(acc_scr.shape, acc_scr.dtype)

    x3 = x_ref[...]                               # (Bt, Tn, L)
    bt, tn = x3.shape[0], x3.shape[1]
    r = bt * tn
    x2 = x3.reshape(r, L)                         # free: Tn is 8-aligned

    # ---- attention MLP: one big MXU matmul over all Bt*Tn instance rows ----
    h = jnp.tanh(jnp.dot(x2, w1t_ref[...], preferred_element_type=jnp.float32)
                 + b1_ref[...])                   # (r, D) f32

    # ---- attention scores, lane-dense (1, r): w2 . h^T on the MXU ----
    s_row = lax.dot_general(
        w2r_ref[...], h,
        dimension_numbers=(((1,), (1,)), ((), ())),
        preferred_element_type=jnp.float32) + b2_ref[0, 0]          # (1, r)

    # ---- per-bag block-diagonal score layout (+ padded-N tail mask) ----
    if bt == 1 and not mask_tail:
        s = s_row                                  # single bag, no tail: no mask
    else:
        col = lax.broadcasted_iota(jnp.int32, (bt, r), 1)
        row0 = lax.broadcasted_iota(jnp.int32, (bt, r), 0) * tn
        if mask_tail:
            valid = jnp.minimum(n_total - n_idx * block_n, tn)
        else:
            valid = tn
        in_bag = (col >= row0) & (col < row0 + valid)
        s = jnp.where(in_bag, jnp.broadcast_to(s_row, (bt, r)), -jnp.inf)

    # ---- online softmax over instances, per bag (lane reductions, dense) ----
    m_prev = m_scr[...]                                            # (Bt, 1)
    m_new = jnp.maximum(m_prev, jnp.max(s, axis=-1, keepdims=True))
    alpha = jnp.exp(m_prev - m_new)                                # (Bt, 1)
    p = jnp.exp(s - m_new)                        # (Bt, r); off-bag/tail -> 0
    l_scr[...] = alpha * l_scr[...] + jnp.sum(p, axis=-1, keepdims=True)

    # ---- attention-weighted pooling on the MXU: block-diag probs @ X ----
    pooled = jnp.dot(p.astype(x2.dtype), x2,
                     preferred_element_type=jnp.float32)           # (Bt, L)
    acc_scr[...] = alpha * acc_scr[...] + pooled
    m_scr[...] = m_new

    @pl.when(n_idx == pl.num_programs(1) - 1)
    def _finalize():
        m_pool = acc_scr[...] * pl.reciprocal(l_scr[...], approx=False)  # (Bt, L)
        # fused lane-dense heads: [classifier | multimodal_projection | pad]
        out_ref[...] = (jnp.dot(m_pool, wh_ref[...],
                                preferred_element_type=jnp.float32)
                        + bh_ref[...]).astype(out_ref.dtype)


def abmil_forward(x, params, *, block_b=None, block_n=None, use_bf16_matmul=True):
    """x: (B, N, L) float32.  Weights stored transposed to (in, out)."""
    B, N, Lx = x.shape
    assert Lx == L
    w1t, b1 = params["w1t"], params["b1"]       # (L, D), (1, D)
    w2, b2 = params["w2"], params["b2"]         # (D, 1), (1, 1)
    wct, bc = params["wct"], params["bc"]       # (L, C), (1, C)
    wpt, bp = params["wpt"], params["bp"]       # (L, P), (1, P)
    C, P = wct.shape[1], wpt.shape[1]

    # fused, lane-padded heads -> one lane-dense (L, Wp) matmul + (Bt, Wp) store
    Wp = _round_up(C + P, _LANE)
    w_heads = (jnp.zeros((L, Wp), jnp.float32)
               .at[:, :C].set(wct).at[:, C:C + P].set(wpt))
    b_heads = (jnp.zeros((1, Wp), jnp.float32)
               .at[:, :C].set(bc).at[:, C:C + P].set(bp))
    w2_row = w2.reshape(1, D).astype(jnp.float32)     # K == 1
    b2_s = b2.reshape(1, 1).astype(jnp.float32)       # scalar, lives in SMEM

    itm = 2 if use_bf16_matmul else 4
    g = 16 if use_bf16_matmul else 8   # bf16 packs 2 rows/sublane -> 16-row tiles

    # ---- per-generation VMEM budget (v7x: 64 MiB/TC; v5e/v6e: 128 MiB) ----
    try:
        vmem_cap = int(pltpu.get_tpu_info().vmem_capacity_bytes)
    except Exception:
        vmem_cap = 128 << 20
    small_vmem = vmem_cap <= (64 << 20)                       # v7x-class part
    x_budget = (20 << 20) if small_vmem else (56 << 20)       # 2x-buffered x window
    vmem_ceiling = (56 << 20) if small_vmem else (112 << 20)  # scoped-VMEM cap

    # hard VMEM bound on rows/step, and a default sizing target (amortizes the
    # ~0.35us/step grid overhead and fills MXU rows).
    budget_rows = max(8, x_budget // (2 * L * itm))
    target_rows = min(2048 if small_vmem else 4096, budget_rows)

    # ---- N (instance) tiling ----
    if block_n is None:
        n8 = _round_up(N, 8)
        block_n = n8 if n8 <= target_rows else max(g, target_rows // g * g)
    else:
        block_n = min(_round_up(block_n, 8), _round_up(N, 8))
    block_n = max(8, int(block_n))

    # ---- bag (batch) tiling: stack bags to reach the row target for short bags ----
    if block_b is None:
        block_b = max(1, target_rows // block_n)
    block_b = int(max(1, min(block_b, B, _MAX_BLOCK_B)))
    if block_b >= B:
        block_b = B                          # full-extent block: always layout-legal
    else:
        block_b = max(8, block_b // 8 * 8)   # partial blocks need sublane granularity
        if block_b >= B:
            block_b = B
    # v7x megacore: keep >=2 blocks on the "parallel" bag axis so both TCs get work
    if small_vmem and block_b == B and B >= 16:
        block_b = max(8, (B // 2) // 8 * 8)

    # joint VMEM constraint: if block_b's sublane round-up pushed the per-step x
    # window over budget, shrink block_n by the same factor (same MXU rows/step).
    while block_b * block_n > budget_rows and block_n > 8:
        block_n = max(8, _round_up(block_n // 2, 8))

    B_pad = _round_up(B, block_b)
    N_pad = _round_up(N, block_n)
    mask_tail = (N_pad != N)
    # every N block keeps >= 1 real row per bag -> no all-masked softmax blocks
    assert N_pad - N < block_n

    if (B_pad, N_pad) != (B, N):
        x = jnp.pad(x, ((0, B_pad - B), (0, N_pad - N), (0, 0)))

    mat_dtype = jnp.bfloat16 if use_bf16_matmul else jnp.float32
    x_in = x.astype(mat_dtype)           # halves x HBM traffic; f32 accumulation
    w1t_in = w1t.astype(mat_dtype)
    b1_in = b1.astype(jnp.float32)       # VPU/EUP math stays f32

    grid = (B_pad // block_b, N_pad // block_n)

    est = (2 * block_b * block_n * L * itm                       # 2x-buffered x
           + 2 * block_b * Wp * 4                                # 2x-buffered out
           + 2 * (L * D * itm + D * 4 + L * Wp * 4 + Wp * 4)     # resident weights
           + block_b * (L + 16) * 4                              # accumulator scratch
           + (8 << 20))                                          # intermediates/headroom
    vmem_limit = int(min(vmem_ceiling, max(24 << 20, est)))

    kernel = functools.partial(abmil_kernel, n_total=N, block_n=block_n,
                               mask_tail=mask_tail)

    out = pl.pallas_call(
        kernel,
        out_shape=jax.ShapeDtypeStruct((B_pad, Wp), jnp.float32),
        grid_spec=pltpu.PrefetchScalarGridSpec(
            num_scalar_prefetch=0,
            grid=grid,
            in_specs=[
                pl.BlockSpec((block_b, block_n, L), lambda b, n: (b, n, 0)),  # x
                pl.BlockSpec((L, D), lambda b, n: (0, 0)),                    # W1^T
                pl.BlockSpec((1, D), lambda b, n: (0, 0)),                    # b1
                pl.BlockSpec((1, D), lambda b, n: (0, 0)),                    # w2 row
                pl.BlockSpec(memory_space=pltpu.MemorySpace.SMEM),            # b2 scalar
                pl.BlockSpec((L, Wp), lambda b, n: (0, 0)),                   # fused head W
                pl.BlockSpec((1, Wp), lambda b, n: (0, 0)),                   # fused head b
            ],
            out_specs=pl.BlockSpec((block_b, Wp), lambda b, n: (b, 0)),
            scratch_shapes=[
                pltpu.VMEM((block_b, 1), jnp.float32),   # running max
                pltpu.VMEM((block_b, 1), jnp.float32),   # running sum
                pltpu.VMEM((block_b, L), jnp.float32),   # pooled-bag accumulator
            ],
        ),
        compiler_params=pltpu.CompilerParams(
            dimension_semantics=("parallel", "arbitrary"),
            vmem_limit_bytes=vmem_limit),
    )(x_in, w1t_in, b1_in, w2_row, b2_s, w_heads, b_heads)

    logits = out[:B, :C]
    encoded = out[:B, C:C + P]
    # module returns (encoded, logits, None)
    return encoded, logits, None


def init_params(key, n_classes, path_dim):
    """Deterministic synthetic init (shapes match the torch module's Linear layers)."""
    ks = jax.random.split(key, 8)
    scale = lambda fan_in: 1.0 / jnp.sqrt(jnp.float32(fan_in))
    return {
        # attention: Linear(L, D), Linear(D, K=1) — stored transposed (in, out)
        "w1t": jax.random.normal(ks[0], (L, D), jnp.float32) * scale(L),
        "b1":  jax.random.normal(ks[1], (1, D), jnp.float32) * 0.01,
        "w2":  jax.random.normal(ks[2], (D, K), jnp.float32) * scale(D),
        "b2":  jax.random.normal(ks[3], (1, 1), jnp.float32) * 0.01,
        # classifier: Linear(L*K, n_classes)
        "wct": jax.random.normal(ks[4], (L * K, n_classes), jnp.float32) * scale(L),
        "bc":  jax.random.normal(ks[5], (1, n_classes), jnp.float32) * 0.01,
        # multimodal_projection: Linear(L*K, path_dim)
        "wpt": jax.random.normal(ks[6], (L * K, path_dim), jnp.float32) * scale(L),
        "bp":  jax.random.normal(ks[7], (1, path_dim), jnp.float32) * 0.01,
    }


def abmil_reference(x, params):
    """Pure-JAX reference (mirrors the torch forward)."""
    h = jnp.tanh(x @ params["w1t"] + params["b1"])           # (B, N, D)
    s = h @ params["w2"] + params["b2"]                      # (B, N, 1)
    a = jax.nn.softmax(jnp.swapaxes(s, 2, 1), axis=2)        # (B, 1, N)
    m = jnp.einsum("bkn,bnl->bkl", a, x).reshape(-1, L * K)  # (B, L)
    logits = m @ params["wct"] + params["bc"]
    encoded = m @ params["wpt"] + params["bp"]
    return encoded, logits


if __name__ == "__main__":
    n_classes, path_dim = 4, 32
    key = jax.random.PRNGKey(0)
    kx, kp, kx2, kx3 = jax.random.split(key, 4)
    params = init_params(kp, n_classes, path_dim)

    # --- small bag test (B=2, N=8) ---
    x = jax.random.normal(kx, (2, 8, L), jnp.float32)
    enc_ref, log_ref = abmil_reference(x, params)

    # exact-math path (f32 MXU operands): must match the reference tightly
    enc32, log32, attn = abmil_forward(x, params, use_bf16_matmul=False)
    jax.block_until_ready((enc32, log32))
    assert enc32.shape == (2, path_dim) and log32.shape == (2, n_classes)
    assert attn is None
    assert jnp.allclose(enc32, enc_ref, atol=2e-4, rtol=2e-4)
    assert jnp.allclose(log32, log_ref, atol=2e-4, rtol=2e-4)

    # performance path (bf16 MXU operands, f32 accumulation): looser tolerance
    enc16, log16, _ = abmil_forward(x, params)
    jax.block_until_ready((enc16, log16))
    assert jnp.allclose(enc16, enc_ref, atol=1e-1, rtol=1e-1)
    assert jnp.allclose(log16, log_ref, atol=1e-1, rtol=1e-1)

    # --- tiled-N online-softmax path with a masked, padded tail ---
    xb = jax.random.normal(kx2, (3, 20, L), jnp.float32)
    enc_t, log_t, _ = abmil_forward(xb, params, block_n=8, use_bf16_matmul=False)
    jax.block_until_ready((enc_t, log_t))
    enc_tr, log_tr = abmil_reference(xb, params)
    assert jnp.allclose(enc_t, enc_tr, atol=2e-4, rtol=2e-4)
    assert jnp.allclose(log_t, log_tr, atol=2e-4, rtol=2e-4)

    # --- multi-bag-block + multi-N-block path (block_b < B, padded B and N) ---
    xc = jax.random.normal(kx3, (12, 72, L), jnp.float32)
    enc_c, log_c, _ = abmil_forward(xc, params, block_b=8, block_n=32,
                                    use_bf16_matmul=False)
    jax.block_until_ready((enc_c, log_c))
    enc_cr, log_cr = abmil_reference(xc, params)
    assert jnp.allclose(enc_c, enc_cr, atol=2e-4, rtol=2e-4)
    assert jnp.allclose(log_c, log_cr, atol=2e-4, rtol=2e-4)

    print("KERNEL_OK")
</pallas_src>

<mosaic_0001>
module attributes {stable_mosaic.version = 11 : i64} {
  func.func @abmil_kernel(%arg0: i32, %arg1: i32, %arg2: memref<2x8x1024xf32, #tpu.memory_space<vmem>>, %arg3: memref<1024x128xf32, #tpu.memory_space<vmem>>, %arg4: memref<1x128xf32, #tpu.memory_space<vmem>>, %arg5: memref<1x128xf32, #tpu.memory_space<vmem>>, %arg6: memref<1x1xf32, #tpu.memory_space<smem>>, %arg7: memref<1024x128xf32, #tpu.memory_space<vmem>>, %arg8: memref<1x128xf32, #tpu.memory_space<vmem>>, %arg9: memref<2x128xf32, #tpu.memory_space<vmem>>, %arg10: memref<2x1xf32, #tpu.memory_space<vmem>>, %arg11: memref<2x1xf32, #tpu.memory_space<vmem>>, %arg12: memref<2x1024xf32, #tpu.memory_space<vmem>>) attributes {dimension_semantics = [#tpu.dimension_semantics<parallel>, #tpu.dimension_semantics<arbitrary>], iteration_bounds = array<i64: 1, 1>, scalar_prefetch = 0 : i64, scratch_operands = 3 : i64, tpu.core_type = #tpu.core_type<tc>, window_params = [{transform_indices = @transform_0, window_bounds = array<i64: 2, 8, 1024>}, {pipeline_mode = #tpu.pipeline_mode<synchronous>, transform_indices = @transform_1, window_bounds = array<i64: 1024, 128>}, {pipeline_mode = #tpu.pipeline_mode<synchronous>, transform_indices = @transform_2, window_bounds = array<i64: 1, 128>}, {pipeline_mode = #tpu.pipeline_mode<synchronous>, transform_indices = @transform_3, window_bounds = array<i64: 1, 128>}, {transform_indices = @transform_4, window_bounds = array<i64: 1, 1>}, {pipeline_mode = #tpu.pipeline_mode<synchronous>, transform_indices = @transform_5, window_bounds = array<i64: 1024, 128>}, {pipeline_mode = #tpu.pipeline_mode<synchronous>, transform_indices = @transform_6, window_bounds = array<i64: 1, 128>}, {transform_indices = @transform_7, window_bounds = array<i64: 2, 128>}]} {
    %c0_i32 = arith.constant 0 : i32
    %0 = arith.cmpi eq, %arg1, %c0_i32 : i32
    %1 = arith.extui %0 : i1 to i32
    %c0_i32_0 = arith.constant 0 : i32
    %2 = arith.cmpi ne, %1, %c0_i32_0 : i32
    scf.if %2 {
      %cst_31 = arith.constant 0xFF800000 : f32
      %54 = vector.broadcast %cst_31 : f32 to vector<2x1xf32>
      %c0_32 = arith.constant 0 : index
      %c0_33 = arith.constant 0 : index
      %55 = vector.load %arg10[%c0_32, %c0_33] : memref<2x1xf32, #tpu.memory_space<vmem>>, vector<2x1xf32>
      tpu.vector_store %arg10[%c0_32, %c0_33], %54 {strides = array<i32>} : memref<2x1xf32, #tpu.memory_space<vmem>>, vector<2x1xf32>,
      %cst_34 = arith.constant 0.000000e+00 : f32
      %56 = vector.broadcast %cst_34 : f32 to vector<2x1xf32>
      %c0_35 = arith.constant 0 : index
      %c0_36 = arith.constant 0 : index
      %57 = vector.load %arg11[%c0_35, %c0_36] : memref<2x1xf32, #tpu.memory_space<vmem>>, vector<2x1xf32>
      tpu.vector_store %arg11[%c0_35, %c0_36], %56 {strides = array<i32>} : memref<2x1xf32, #tpu.memory_space<vmem>>, vector<2x1xf32>,
      %cst_37 = arith.constant 0.000000e+00 : f32
      %58 = vector.broadcast %cst_37 : f32 to vector<2x1024xf32>
      %c0_38 = arith.constant 0 : index
      %c0_39 = arith.constant 0 : index
      %59 = vector.load %arg12[%c0_38, %c0_39] : memref<2x1024xf32, #tpu.memory_space<vmem>>, vector<2x1024xf32>
      tpu.vector_store %arg12[%c0_38, %c0_39], %58 {strides = array<i32>} : memref<2x1024xf32, #tpu.memory_space<vmem>>, vector<2x1024xf32>,
    } else {
    }
    %c0 = arith.constant 0 : index
    %c0_1 = arith.constant 0 : index
    %c0_2 = arith.constant 0 : index
    %3 = vector.load %arg2[%c0, %c0_1, %c0_2] : memref<2x8x1024xf32, #tpu.memory_space<vmem>>, vector<2x8x1024xf32>
    %4 = vector.shape_cast %3 : vector<2x8x1024xf32> to vector<16x1024xf32>
    %c0_3 = arith.constant 0 : index
    %c0_4 = arith.constant 0 : index
    %5 = vector.load %arg3[%c0_3, %c0_4] : memref<1024x128xf32, #tpu.memory_space<vmem>>, vector<1024x128xf32>
    %cst = arith.constant dense<0.000000e+00> : vector<16x128xf32>
    %6 = tpu.matmul %4, %5, %cst {dimension_numbers = #tpu.dot_dimension_numbers<[1], [0], [0], [1], [0, 0, 1, 1], [], []>} : vector<16x1024xf32>, vector<1024x128xf32>, vector<16x128xf32> -> vector<16x128xf32>
    %c0_5 = arith.constant 0 : index
    %c0_6 = arith.constant 0 : index
    %7 = vector.load %arg4[%c0_5, %c0_6] : memref<1x128xf32, #tpu.memory_space<vmem>>, vector<1x128xf32>
    %8 = vector.broadcast %7 : vector<1x128xf32> to vector<16x128xf32>
    %9 = arith.addf %6, %8 : vector<16x128xf32>
    %10 = math.tanh %9 : vector<16x128xf32>
    %c0_7 = arith.constant 0 : index
    %c0_8 = arith.constant 0 : index
    %11 = vector.load %arg5[%c0_7, %c0_8] : memref<1x128xf32, #tpu.memory_space<vmem>>, vector<1x128xf32>
    %cst_9 = arith.constant dense<0.000000e+00> : vector<1x16xf32>
    %12 = tpu.matmul %11, %10, %cst_9 {dimension_numbers = #tpu.dot_dimension_numbers<[1], [1], [0], [0], [0, 0, 1, 0], [], []>} : vector<1x128xf32>, vector<16x128xf32>, vector<1x16xf32> -> vector<1x16xf32>
    %c0_10 = arith.constant 0 : index
    %c0_11 = arith.constant 0 : index
    %13 = memref.load %arg6[%c0_10, %c0_11] : memref<1x1xf32, #tpu.memory_space<smem>>
    %14 = vector.broadcast %13 : f32 to vector<1x16xf32>
    %15 = arith.addf %12, %14 : vector<1x16xf32>
    %16 = tpu.iota {dimensions = array<i32: 1>} : vector<2x16xi32>
    %17 = tpu.iota {dimensions = array<i32: 0>} : vector<2x16xi32>
    %c8_i32 = arith.constant 8 : i32
    %18 = vector.broadcast %c8_i32 : i32 to vector<2x16xi32>
    %19 = arith.muli %17, %18 : vector<2x16xi32>
    %20 = arith.cmpi sge, %16, %19 : vector<2x16xi32>
    %c8_i32_12 = arith.constant 8 : i32
    %21 = vector.broadcast %c8_i32_12 : i32 to vector<2x16xi32>
    %22 = arith.addi %19, %21 : vector<2x16xi32>
    %23 = arith.cmpi slt, %16, %22 : vector<2x16xi32>
    %24 = arith.andi %20, %23 : vector<2x16xi1>
    %25 = vector.shape_cast %15 : vector<1x16xf32> to vector<1x16xf32>
    %26 = vector.broadcast %25 : vector<1x16xf32> to vector<2x16xf32>
    %cst_13 = arith.constant 0xFF800000 : f32
    %27 = vector.broadcast %cst_13 : f32 to vector<2x16xf32>
    %28 = arith.select %24, %26, %27 : vector<2x16xi1>, vector<2x16xf32>
    %c0_14 = arith.constant 0 : index
    %c0_15 = arith.constant 0 : index
    %29 = vector.load %arg10[%c0_14, %c0_15] : memref<2x1xf32, #tpu.memory_space<vmem>>, vector<2x1xf32>
    %cst_16 = arith.constant dense<0xFF800000> : vector<2xf32>
    %30 = vector.multi_reduction <maximumf>, %28, %cst_16 [1] : vector<2x16xf32> to vector<2xf32>
    %31 = vector.shape_cast %30 : vector<2xf32> to vector<2x1xf32>
    %32 = arith.maximumf %29, %31 : vector<2x1xf32>
    %33 = arith.subf %29, %32 : vector<2x1xf32>
    %34 = math.exp %33 : vector<2x1xf32>
    %35 = vector.broadcast %32 : vector<2x1xf32> to vector<2x16xf32>
    %36 = arith.subf %28, %35 : vector<2x16xf32>
    %37 = math.exp %36 : vector<2x16xf32>
    %c0_17 = arith.constant 0 : index
    %c0_18 = arith.constant 0 : index
    %38 = vector.load %arg11[%c0_17, %c0_18] : memref<2x1xf32, #tpu.memory_space<vmem>>, vector<2x1xf32>
    %39 = arith.mulf %34, %38 : vector<2x1xf32>
    %cst_19 = arith.constant dense<0.000000e+00> : vector<2xf32>
    %40 = vector.multi_reduction <add>, %37, %cst_19 [1] : vector<2x16xf32> to vector<2xf32>
    %41 = vector.shape_cast %40 : vector<2xf32> to vector<2x1xf32>
    %42 = arith.addf %39, %41 : vector<2x1xf32>
    %c0_20 = arith.constant 0 : index
    %c0_21 = arith.constant 0 : index
    %43 = vector.load %arg11[%c0_20, %c0_21] : memref<2x1xf32, #tpu.memory_space<vmem>>, vector<2x1xf32>
    tpu.vector_store %arg11[%c0_20, %c0_21], %42 {strides = array<i32>} : memref<2x1xf32, #tpu.memory_space<vmem>>, vector<2x1xf32>,
    %cst_22 = arith.constant dense<0.000000e+00> : vector<2x1024xf32>
    %44 = tpu.matmul %37, %4, %cst_22 {dimension_numbers = #tpu.dot_dimension_numbers<[1], [0], [0], [1], [0, 0, 1, 1], [], []>} : vector<2x16xf32>, vector<16x1024xf32>, vector<2x1024xf32> -> vector<2x1024xf32>
    %c0_23 = arith.constant 0 : index
    %c0_24 = arith.constant 0 : index
    %45 = vector.load %arg12[%c0_23, %c0_24] : memref<2x1024xf32, #tpu.memory_space<vmem>>, vector<2x1024xf32>
    %46 = vector.broadcast %34 : vector<2x1xf32> to vector<2x1024xf32>
    %47 = arith.mulf %46, %45 : vector<2x1024xf32>
    %48 = arith.addf %47, %44 : vector<2x1024xf32>
    %c0_25 = arith.constant 0 : index
    %c0_26 = arith.constant 0 : index
    %49 = vector.load %arg12[%c0_25, %c0_26] : memref<2x1024xf32, #tpu.memory_space<vmem>>, vector<2x1024xf32>
    tpu.vector_store %arg12[%c0_25, %c0_26], %48 {strides = array<i32>} : memref<2x1024xf32, #tpu.memory_space<vmem>>, vector<2x1024xf32>,
    %c0_27 = arith.constant 0 : index
    %c0_28 = arith.constant 0 : index
    %50 = vector.load %arg10[%c0_27, %c0_28] : memref<2x1xf32, #tpu.memory_space<vmem>>, vector<2x1xf32>
    tpu.vector_store %arg10[%c0_27, %c0_28], %32 {strides = array<i32>} : memref<2x1xf32, #tpu.memory_space<vmem>>, vector<2x1xf32>,
    %c0_i32_29 = arith.constant 0 : i32
    %51 = arith.cmpi eq, %arg1, %c0_i32_29 : i32
    %52 = arith.extui %51 : i1 to i32
    %c0_i32_30 = arith.constant 0 : i32
    %53 = arith.cmpi ne, %52, %c0_i32_30 : i32
    scf.if %53 {
      %c0_31 = arith.constant 0 : index
      %c0_32 = arith.constant 0 : index
      %54 = vector.load %arg12[%c0_31, %c0_32] : memref<2x1024xf32, #tpu.memory_space<vmem>>, vector<2x1024xf32>
      %c0_33 = arith.constant 0 : index
      %c0_34 = arith.constant 0 : index
      %55 = vector.load %arg11[%c0_33, %c0_34] : memref<2x1xf32, #tpu.memory_space<vmem>>, vector<2x1xf32>
      %56 = tpu.reciprocal %55 : vector<2x1xf32> -> vector<2x1xf32>
      %57 = vector.broadcast %56 : vector<2x1xf32> to vector<2x1024xf32>
      %58 = arith.mulf %54, %57 : vector<2x1024xf32>
      %c0_35 = arith.constant 0 : index
      %c0_36 = arith.constant 0 : index
      %59 = vector.load %arg7[%c0_35, %c0_36] : memref<1024x128xf32, #tpu.memory_space<vmem>>, vector<1024x128xf32>
      %cst_37 = arith.constant dense<0.000000e+00> : vector<2x128xf32>
      %60 = tpu.matmul %58, %59, %cst_37 {dimension_numbers = #tpu.dot_dimension_numbers<[1], [0], [0], [1], [0, 0, 1, 1], [], []>} : vector<2x1024xf32>, vector<1024x128xf32>, vector<2x128xf32> -> vector<2x128xf32>
      %c0_38 = arith.constant 0 : index
      %c0_39 = arith.constant 0 : index
      %61 = vector.load %arg8[%c0_38, %c0_39] : memref<1x128xf32, #tpu.memory_space<vmem>>, vector<1x128xf32>
      %62 = vector.broadcast %61 : vector<1x128xf32> to vector<2x128xf32>
      %63 = arith.addf %60, %62 : vector<2x128xf32>
      %c0_40 = arith.constant 0 : index
      %c0_41 = arith.constant 0 : index
      %64 = vector.load %arg9[%c0_40, %c0_41] : memref<2x128xf32, #tpu.memory_space<vmem>>, vector<2x128xf32>
      tpu.vector_store %arg9[%c0_40, %c0_41], %63 {strides = array<i32>} : memref<2x128xf32, #tpu.memory_space<vmem>>, vector<2x128xf32>,
    } else {
    }
    return
  }
  func.func @transform_0(%arg0: i32, %arg1: i32) -> (i32, i32, i32) {
    %c0_i32 = arith.constant 0 : i32
    %c0_i32_0 = arith.constant 0 : i32
    return %arg0, %arg1, %c0_i32 : i32, i32, i32
  }
  func.func @transform_1(%arg0: i32, %arg1: i32) -> (i32, i32) {
    %c0_i32 = arith.constant 0 : i32
    %c0_i32_0 = arith.constant 0 : i32
    %c0_i32_1 = arith.constant 0 : i32
    return %c0_i32, %c0_i32_0 : i32, i32
  }
  func.func @transform_2(%arg0: i32, %arg1: i32) -> (i32, i32) {
    %c0_i32 = arith.constant 0 : i32
    %c0_i32_0 = arith.constant 0 : i32
    %c0_i32_1 = arith.constant 0 : i32
    return %c0_i32, %c0_i32_0 : i32, i32
  }
  func.func @transform_3(%arg0: i32, %arg1: i32) -> (i32, i32) {
    %c0_i32 = arith.constant 0 : i32
    %c0_i32_0 = arith.constant 0 : i32
    %c0_i32_1 = arith.constant 0 : i32
    return %c0_i32, %c0_i32_0 : i32, i32
  }
  func.func @transform_4(%arg0: i32, %arg1: i32) -> (i32, i32) {
    %c0_i32 = arith.constant 0 : i32
    %c0_i32_0 = arith.constant 0 : i32
    %c0_i32_1 = arith.constant 0 : i32
    return %c0_i32, %c0_i32_0 : i32, i32
  }
  func.func @transform_5(%arg0: i32, %arg1: i32) -> (i32, i32) {
    %c0_i32 = arith.constant 0 : i32
    %c0_i32_0 = arith.constant 0 : i32
    %c0_i32_1 = arith.constant 0 : i32
    return %c0_i32, %c0_i32_0 : i32, i32
  }
  func.func @transform_6(%arg0: i32, %arg1: i32) -> (i32, i32) {
    %c0_i32 = arith.constant 0 : i32
    %c0_i32_0 = arith.constant 0 : i32
    %c0_i32_1 = arith.constant 0 : i32
    return %c0_i32, %c0_i32_0 : i32, i32
  }
  func.func @transform_7(%arg0: i32, %arg1: i32) -> (i32, i32) {
    %c0_i32 = arith.constant 0 : i32
    %c0_i32_0 = arith.constant 0 : i32
    return %arg0, %c0_i32 : i32, i32
  }
}

</mosaic_0001>

<llo_original>
// kernel: tpu_custom_call.1
$region0: #{tpu_custom_call.1}
  #allocation0 [shape = 'u32[]', space=smem, size = 0x4, offset = 0x4, fixed_abs, tag = 'smem constant byte address 0x4 - core index']
  #allocation1 [shape = 'u32[72,128]{1,0:T(1,128)}', space=vmem, size = 0x9000, scoped, tag = 'internal scratch']
  #allocation2 [shape = 'f32[2,1]{1,0:T(2,128)}', space=vmem, size = 0x400, scoped, tag = 'scratch operand']
  #allocation3 [shape = 'f32[2,1]{1,0:T(2,128)}', space=vmem, size = 0x400, scoped, tag = 'scratch operand']
  #allocation4 [shape = 'f32[2,1024]{1,0:T(2,128)}', space=vmem, size = 0x2000, scoped, tag = 'scratch operand']
  #allocation5 [shape = 'f32[1,1]{1,0:T(1,128)S(6)}', space=smem, size = 0x200, scoped, tag = 'scoped memory for tpu_custom_call.1']
  %s0 = inlined_call_operand.hbm [shape: f32[2,8,1024], index: 0, kind: input, shape index: {}]
  %s1 = inlined_call_operand.hbm [shape: f32[1024,128], index: 1, kind: input, shape index: {}]
  %s2 = inlined_call_operand.vmem [shape: f32[1,128], index: 2, kind: input, shape index: {}]
  %s3 = inlined_call_operand.vmem [shape: f32[1,128], index: 3, kind: input, shape index: {}]
  %s4 = inlined_call_operand.<no memory space> [shape: f32[1,1], index: 4, kind: input, shape index: {}]
  %s5 = inlined_call_operand.hbm [shape: f32[1024,128], index: 5, kind: input, shape index: {}]
  %s6 = inlined_call_operand.vmem [shape: f32[1,128], index: 6, kind: input, shape index: {}]
  %s7 = inlined_call_operand.hbm [shape: f32[2,128], index: 7, kind: output, shape index: {}]
  %s8 = sld [smem:[#allocation0]]
  $region58: #{tpu_custom_call.1} parent=0
    _
  %s10 = ssub.s32 1, %s8
  %s11 = scalar_select 0, %s10, %s8
  %12 = sst [smem:[#allocation5]] %s4
  $region1: #{tpu_custom_call.1} parent=0
    #allocation6 [shape = 'u8[65536]{0}', space=vmem, size = 0x10000, scoped, tag = 'input window, operand 0, single buffered']
    #allocation7 [shape = 's32[1]{0}', space=sflag, size = 0x4, scoped, tag = 'scoped memory for tpu_custom_call.1']
    #allocation8 [shape = 's32[1]{0}', space=sflag, size = 0x4, scoped, tag = 'scoped memory for tpu_custom_call.1']
    #allocation9 [shape = 'u8[524288]{0}', space=vmem, size = 0x80000, scoped, tag = 'input window, operand 1, single buffered']
    #allocation10 [shape = 's32[1]{0}', space=sflag, size = 0x4, scoped, tag = 'scoped memory for tpu_custom_call.1']
    #allocation11 [shape = 'u8[524288]{0}', space=vmem, size = 0x80000, scoped, tag = 'input window, operand 5, single buffered']
    #allocation12 [shape = 'u8[1024]{0}', space=vmem, size = 0x400, scoped, tag = 'output window, operand 0, single buffered']
    %13 = vsyncpa [#allocation7], 0
    %14 = vsyncpa [#allocation10], 0
    %15 = vsyncpa [#allocation8], 0
    // Predicated region
    $region2: #{tpu_custom_call.1} parent=1 // pred_check
      _
    $region3: #{tpu_custom_call.1} parent=1 // pred_check_branch
      %17 = sbr.rel (0) target = $region5
    $region4: #{tpu_custom_call.1} parent=1 // pred_region
      %19 = vsyncadd [#allocation7], 0
      %s20 = sshll.u32 %s0, 4
      %s21 = int_to_ptr.hbm [resolvable:$true] %s20
      %s22 = sshll.u32 [#allocation6], 4
      %s23 = int_to_ptr.vmem [resolvable:$true] %s22
      %28 = dma.hbm_to_vmem [thread:$0]  %s21, 2048, %s23, [#allocation7], 1024, 1024, 64
    $region5: #{tpu_custom_call.1} parent=1 // pred_fallthru
      _
    // Predicated region
    $region6: #{tpu_custom_call.1} parent=1 // pred_check
      _
    $region7: #{tpu_custom_call.1} parent=1 // pred_check_branch
      %30 = sbr.rel (0) target = $region9
    $region8: #{tpu_custom_call.1} parent=1 // pred_region
      %32 = vsyncadd [#allocation10], 0
      %s33 = sshll.u32 %s1, 4
      %s34 = int_to_ptr.hbm [resolvable:$true] %s33
      %s35 = sshll.u32 [#allocation9], 4
      %s36 = int_to_ptr.vmem [resolvable:$true] %s35
      %41 = dma.hbm_to_vmem [thread:$0]  %s34, 16384, %s36, [#allocation10], 128, 128, 8
    $region9: #{tpu_custom_call.1} parent=1 // pred_fallthru
      _
    // Predicated region
    $region10: #{tpu_custom_call.1} parent=1 // pred_check
      _
    $region11: #{tpu_custom_call.1} parent=1 // pred_check_branch
      %43 = sbr.rel (0) target = $region13
    $region12: #{tpu_custom_call.1} parent=1 // pred_region
      _
    $region13: #{tpu_custom_call.1} parent=1 // pred_fallthru
      _
    // Predicated region
    $region14: #{tpu_custom_call.1} parent=1 // pred_check
      _
    $region15: #{tpu_custom_call.1} parent=1 // pred_check_branch
      %45 = sbr.rel (0) target = $region17
    $region16: #{tpu_custom_call.1} parent=1 // pred_region
      _
    $region17: #{tpu_custom_call.1} parent=1 // pred_fallthru
      _
    // Predicated region
    $region18: #{tpu_custom_call.1} parent=1 // pred_check
      _
    $region19: #{tpu_custom_call.1} parent=1 // pred_check_branch
      %47 = sbr.rel (0) target = $region21
    $region20: #{tpu_custom_call.1} parent=1 // pred_region
      _
    $region21: #{tpu_custom_call.1} parent=1 // pred_fallthru
      _
    // Predicated region
    $region22: #{tpu_custom_call.1} parent=1 // pred_check
      _
    $region23: #{tpu_custom_call.1} parent=1 // pred_check_branch
      %49 = sbr.rel (0) target = $region25
    $region24: #{tpu_custom_call.1} parent=1 // pred_region
      %51 = vsyncadd [#allocation10], 0
      %s52 = sshll.u32 %s5, 4
      %s53 = int_to_ptr.hbm [resolvable:$true] %s52
      %s54 = sshll.u32 [#allocation11], 4
      %s55 = int_to_ptr.vmem [resolvable:$true] %s54
      %60 = dma.hbm_to_vmem [thread:$0]  %s53, 16384, %s55, [#allocation10], 128, 128, 8
    $region25: #{tpu_custom_call.1} parent=1 // pred_fallthru
      _
    // Predicated region
    $region26: #{tpu_custom_call.1} parent=1 // pred_check
      _
    $region27: #{tpu_custom_call.1} parent=1 // pred_check_branch
      %62 = sbr.rel (0) target = $region29
    $region28: #{tpu_custom_call.1} parent=1 // pred_region
      _
    $region29: #{tpu_custom_call.1} parent=1 // pred_fallthru
      _
    // Predicated region
    $region30: #{tpu_custom_call.1} parent=1 // pred_check
      _
    $region31: #{tpu_custom_call.1} parent=1 // pred_check_branch
      %64 = sbr.rel (0) target = $region33
    $region32: #{tpu_custom_call.1} parent=1 // pred_region
      %66 = dma.done [#allocation7], 2048
    $region33: #{tpu_custom_call.1} parent=1 // pred_fallthru
      _
    // Predicated region
    $region34: #{tpu_custom_call.1} parent=1 // pred_check
      _
    $region35: #{tpu_custom_call.1} parent=1 // pred_check_branch
      %68 = sbr.rel (0) target = $region37
    $region36: #{tpu_custom_call.1} parent=1 // pred_region
      %70 = dma.done [#allocation10], 16384
    $region37: #{tpu_custom_call.1} parent=1 // pred_fallthru
      _
    // Predicated region
    $region38: #{tpu_custom_call.1} parent=1 // pred_check
      _
    $region39: #{tpu_custom_call.1} parent=1 // pred_check_branch
      %72 = sbr.rel (0) target = $region41
    $region40: #{tpu_custom_call.1} parent=1 // pred_region
      %74 = dma.done [#allocation10], 16384
    $region41: #{tpu_custom_call.1} parent=1 // pred_fallthru
      _
    %p75 = scmp.eq.s32.totalorder 0, 0
    // Predicated region
    $region42: #{tpu_custom_call.1} parent=1 // pred_check
      %p76 = pneg %p75
    $region43: #{tpu_custom_call.1} parent=1 // pred_check_branch
      %78 = sbr.rel (%p76) target = $region45
    $region44: #{tpu_custom_call.1} parent=1 // pred_region
      %vm79 = vcmask 1024
      %80 = vst.msk [vmem:[#allocation2] sm:$0x3] %vm79, -inf
      %81 = vst.msk [vmem:[#allocation3] sm:$0x3] %vm79, 0.0
      %82 = vst [vmem:[#allocation4] sm:$0xff] 0.0
      %83 = vst [vmem:[#allocation4 + $0x8] sm:$0xff] 0.0
    $region45: #{tpu_custom_call.1} parent=1 // pred_fallthru
      _
    %v84 = vld [vmem:[#allocation6] sm:$0xff]
    %v85 = vld [vmem:[#allocation6 + $0x8] sm:$0xff]
    %v86 = vld [vmem:[#allocation6 + $0x10] sm:$0xff]
    %v87 = vld [vmem:[#allocation6 + $0x18] sm:$0xff]
    %v88 = vld [vmem:[#allocation6 + $0x20] sm:$0xff]
    %v89 = vld [vmem:[#allocation6 + $0x28] sm:$0xff]
    %v90 = vld [vmem:[#allocation6 + $0x30] sm:$0xff]
    %v91 = vld [vmem:[#allocation6 + $0x38] sm:$0xff]
    %v92 = vld [vmem:[#allocation6 + $0x40] sm:$0xff]
    %v93 = vld [vmem:[#allocation6 + $0x48] sm:$0xff]
    %v94 = vld [vmem:[#allocation6 + $0x50] sm:$0xff]
    %v95 = vld [vmem:[#allocation6 + $0x58] sm:$0xff]
    %v96 = vld [vmem:[#allocation6 + $0x60] sm:$0xff]
    %v97 = vld [vmem:[#allocation6 + $0x68] sm:$0xff]
    %v98 = vld [vmem:[#allocation6 + $0x70] sm:$0xff]
    %v99 = vld [vmem:[#allocation6 + $0x78] sm:$0xff]
    %v100 = vld [vmem:[#allocation9] sm:$0xff]
    %v101 = vld [vmem:[#allocation9 + $0x8] sm:$0xff]
    %v102 = vld [vmem:[#allocation9 + $0x10] sm:$0xff]
    %v103 = vld [vmem:[#allocation9 + $0x18] sm:$0xff]
    %v104 = vld [vmem:[#allocation9 + $0x20] sm:$0xff]
    %v105 = vld [vmem:[#allocation9 + $0x28] sm:$0xff]
    %v106 = vld [vmem:[#allocation9 + $0x30] sm:$0xff]
    %v107 = vld [vmem:[#allocation9 + $0x38] sm:$0xff]
    %v108 = vld [vmem:[#allocation9 + $0x40] sm:$0xff]
    %v109 = vld [vmem:[#allocation9 + $0x48] sm:$0xff]
    %v110 = vld [vmem:[#allocation9 + $0x50] sm:$0xff]
    %v111 = vld [vmem:[#allocation9 + $0x58] sm:$0xff]
    %v112 = vld [vmem:[#allocation9 + $0x60] sm:$0xff]
    %v113 = vld [vmem:[#allocation9 + $0x68] sm:$0xff]
    %v114 = vld [vmem:[#allocation9 + $0x70] sm:$0xff]
    %v115 = vld [vmem:[#allocation9 + $0x78] sm:$0xff]
    %v116 = vld [vmem:[#allocation9 + $0x80] sm:$0xff]
    %v117 = vld [vmem:[#allocation9 + $0x88] sm:$0xff]
    %v118 = vld [vmem:[#allocation9 + $0x90] sm:$0xff]
    %v119 = vld [vmem:[#allocation9 + $0x98] sm:$0xff]
    %v120 = vld [vmem:[#allocation9 + $0xa0] sm:$0xff]
    %v121 = vld [vmem:[#allocation9 + $0xa8] sm:$0xff]
    %v122 = vld [vmem:[#allocation9 + $0xb0] sm:$0xff]
    %v123 = vld [vmem:[#allocation9 + $0xb8] sm:$0xff]
    %v124 = vld [vmem:[#allocation9 + $0xc0] sm:$0xff]
    %v125 = vld [vmem:[#allocation9 + $0xc8] sm:$0xff]
    %v126 = vld [vmem:[#allocation9 + $0xd0] sm:$0xff]
    %v127 = vld [vmem:[#allocation9 + $0xd8] sm:$0xff]
    %v128 = vld [vmem:[#allocation9 + $0xe0] sm:$0xff]
    %v129 = vld [vmem:[#allocation9 + $0xe8] sm:$0xff]
    %v130 = vld [vmem:[#allocation9 + $0xf0] sm:$0xff]
    %v131 = vld [vmem:[#allocation9 + $0xf8] sm:$0xff]
    %v132 = vld [vmem:[#allocation9 + $0x100] sm:$0xff]
    %v133 = vld [vmem:[#allocation9 + $0x108] sm:$0xff]
    %v134 = vld [vmem:[#allocation9 + $0x110] sm:$0xff]
    %v135 = vld [vmem:[#allocation9 + $0x118] sm:$0xff]
    %v136 = vld [vmem:[#allocation9 + $0x120] sm:$0xff]
    %v137 = vld [vmem:[#allocation9 + $0x128] sm:$0xff]
    %v138 = vld [vmem:[#allocation9 + $0x130] sm:$0xff]
    %v139 = vld [vmem:[#allocation9 + $0x138] sm:$0xff]
    %v140 = vld [vmem:[#allocation9 + $0x140] sm:$0xff]
    %v141 = vld [vmem:[#allocation9 + $0x148] sm:$0xff]
    %v142 = vld [vmem:[#allocation9 + $0x150] sm:$0xff]
    %v143 = vld [vmem:[#allocation9 + $0x158] sm:$0xff]
    %v144 = vld [vmem:[#allocation9 + $0x160] sm:$0xff]
    %v145 = vld [vmem:[#allocation9 + $0x168] sm:$0xff]
    %v146 = vld [vmem:[#allocation9 + $0x170] sm:$0xff]
    %v147 = vld [vmem:[#allocation9 + $0x178] sm:$0xff]
    %v148 = vld [vmem:[#allocation9 + $0x180] sm:$0xff]
    %v149 = vld [vmem:[#allocation9 + $0x188] sm:$0xff]
    %v150 = vld [vmem:[#allocation9 + $0x190] sm:$0xff]
    %v151 = vld [vmem:[#allocation9 + $0x198] sm:$0xff]
    %v152 = vld [vmem:[#allocation9 + $0x1a0] sm:$0xff]
    %v153 = vld [vmem:[#allocation9 + $0x1a8] sm:$0xff]
    %v154 = vld [vmem:[#allocation9 + $0x1b0] sm:$0xff]
    %v155 = vld [vmem:[#allocation9 + $0x1b8] sm:$0xff]
    %v156 = vld [vmem:[#allocation9 + $0x1c0] sm:$0xff]
    %v157 = vld [vmem:[#allocation9 + $0x1c8] sm:$0xff]
    %v158 = vld [vmem:[#allocation9 + $0x1d0] sm:$0xff]
    %v159 = vld [vmem:[#allocation9 + $0x1d8] sm:$0xff]
    %v160 = vld [vmem:[#allocation9 + $0x1e0] sm:$0xff]
    %v161 = vld [vmem:[#allocation9 + $0x1e8] sm:$0xff]
    %v162 = vld [vmem:[#allocation9 + $0x1f0] sm:$0xff]
    %v163 = vld [vmem:[#allocation9 + $0x1f8] sm:$0xff]
    %v164 = vld [vmem:[#allocation9 + $0x200] sm:$0xff]
    %v165 = vld [vmem:[#allocation9 + $0x208] sm:$0xff]
    %v166 = vld [vmem:[#allocation9 + $0x210] sm:$0xff]
    %v167 = vld [vmem:[#allocation9 + $0x218] sm:$0xff]
    %v168 = vld [vmem:[#allocation9 + $0x220] sm:$0xff]
    %v169 = vld [vmem:[#allocation9 + $0x228] sm:$0xff]
    %v170 = vld [vmem:[#allocation9 + $0x230] sm:$0xff]
    %v171 = vld [vmem:[#allocation9 + $0x238] sm:$0xff]
    %v172 = vld [vmem:[#allocation9 + $0x240] sm:$0xff]
    %v173 = vld [vmem:[#allocation9 + $0x248] sm:$0xff]
    %v174 = vld [vmem:[#allocation9 + $0x250] sm:$0xff]
    %v175 = vld [vmem:[#allocation9 + $0x258] sm:$0xff]
    %v176 = vld [vmem:[#allocation9 + $0x260] sm:$0xff]
    %v177 = vld [vmem:[#allocation9 + $0x268] sm:$0xff]
    %v178 = vld [vmem:[#allocation9 + $0x270] sm:$0xff]
    %v179 = vld [vmem:[#allocation9 + $0x278] sm:$0xff]
    %v180 = vld [vmem:[#allocation9 + $0x280] sm:$0xff]
    %v181 = vld [vmem:[#allocation9 + $0x288] sm:$0xff]
    %v182 = vld [vmem:[#allocation9 + $0x290] sm:$0xff]
    %v183 = vld [vmem:[#allocation9 + $0x298] sm:$0xff]
    %v184 = vld [vmem:[#allocation9 + $0x2a0] sm:$0xff]
    %v185 = vld [vmem:[#allocation9 + $0x2a8] sm:$0xff]
    %v186 = vld [vmem:[#allocation9 + $0x2b0] sm:$0xff]
    %v187 = vld [vmem:[#allocation9 + $0x2b8] sm:$0xff]
    %v188 = vld [vmem:[#allocation9 + $0x2c0] sm:$0xff]
    %v189 = vld [vmem:[#allocation9 + $0x2c8] sm:$0xff]
    %v190 = vld [vmem:[#allocation9 + $0x2d0] sm:$0xff]
    %v191 = vld [vmem:[#allocation9 + $0x2d8] sm:$0xff]
    %v192 = vld [vmem:[#allocation9 + $0x2e0] sm:$0xff]
    %v193 = vld [vmem:[#allocation9 + $0x2e8] sm:$0xff]
    %v194 = vld [vmem:[#allocation9 + $0x2f0] sm:$0xff]
    %v195 = vld [vmem:[#allocation9 + $0x2f8] sm:$0xff]
    %v196 = vld [vmem:[#allocation9 + $0x300] sm:$0xff]
    %v197 = vld [vmem:[#allocation9 + $0x308] sm:$0xff]
    %v198 = vld [vmem:[#allocation9 + $0x310] sm:$0xff]
    %v199 = vld [vmem:[#allocation9 + $0x318] sm:$0xff]
    %v200 = vld [vmem:[#allocation9 + $0x320] sm:$0xff]
    %v201 = vld [vmem:[#allocation9 + $0x328] sm:$0xff]
    %v202 = vld [vmem:[#allocation9 + $0x330] sm:$0xff]
    %v203 = vld [vmem:[#allocation9 + $0x338] sm:$0xff]
    %v204 = vld [vmem:[#allocation9 + $0x340] sm:$0xff]
    %v205 = vld [vmem:[#allocation9 + $0x348] sm:$0xff]
    %v206 = vld [vmem:[#allocation9 + $0x350] sm:$0xff]
    %v207 = vld [vmem:[#allocation9 + $0x358] sm:$0xff]
    %v208 = vld [vmem:[#allocation9 + $0x360] sm:$0xff]
    %v209 = vld [vmem:[#allocation9 + $0x368] sm:$0xff]
    %v210 = vld [vmem:[#allocation9 + $0x370] sm:$0xff]
    %v211 = vld [vmem:[#allocation9 + $0x378] sm:$0xff]
    %v212 = vld [vmem:[#allocation9 + $0x380] sm:$0xff]
    %v213 = vld [vmem:[#allocation9 + $0x388] sm:$0xff]
    %v214 = vld [vmem:[#allocation9 + $0x390] sm:$0xff]
    %v215 = vld [vmem:[#allocation9 + $0x398] sm:$0xff]
    %v216 = vld [vmem:[#allocation9 + $0x3a0] sm:$0xff]
    %v217 = vld [vmem:[#allocation9 + $0x3a8] sm:$0xff]
    %v218 = vld [vmem:[#allocation9 + $0x3b0] sm:$0xff]
    %v219 = vld [vmem:[#allocation9 + $0x3b8] sm:$0xff]
    %v220 = vld [vmem:[#allocation9 + $0x3c0] sm:$0xff]
    %v221 = vld [vmem:[#allocation9 + $0x3c8] sm:$0xff]
    %v222 = vld [vmem:[#allocation9 + $0x3d0] sm:$0xff]
    %v223 = vld [vmem:[#allocation9 + $0x3d8] sm:$0xff]
    %v224 = vld [vmem:[#allocation9 + $0x3e0] sm:$0xff]
    %v225 = vld [vmem:[#allocation9 + $0x3e8] sm:$0xff]
    %v226 = vld [vmem:[#allocation9 + $0x3f0] sm:$0xff]
    %v227 = vld [vmem:[#allocation9 + $0x3f8] sm:$0xff]
    %v228 = vld [vmem:[%s2] sm:$0x1]
    %v230 = vperm.slane %v228, 0
    %232 = vmatpush.msra.mxu0 %v115
    %233 = vmatpush.msra.mxu0 %v114
    %234 = vmatpush.msra.mxu0 %v113
    %235 = vmatpush.msra.mxu0 %v112
    %236 = vmatpush.msra.mxu0 %v111
    %237 = vmatpush.msra.mxu0 %v110
    %238 = vmatpush.msra.mxu0 %v109
    %239 = vmatpush.msra.mxu0 %v108
    %240 = vmatpush.msra.mxu0 %v107
    %241 = vmatpush.msra.mxu0 %v106
    %242 = vmatpush.msra.mxu0 %v105
    %243 = vmatpush.msra.mxu0 %v104
    %244 = vmatpush.msra.mxu0 %v103
    %245 = vmatpush.msra.mxu0 %v102
    %246 = vmatpush.msra.mxu0 %v101
    %247 = vmatpush.msra.mxu0 %v100
    %248 = vmatmul.f32.gmra.mxu0 %v84
    %v249 = vpop.f32.mrf.mxu0
    %v250 = vadd.f32 %v230, %v249
    %251 = vmatmul.f32.gmra.mxu0 %v92
    %v252 = vpop.f32.mrf.mxu0
    %v253 = vadd.f32 %v230, %v252
    %254 = vdwg.mxu0
    %255 = vmatpush.msra.mxu0 %v131
    %256 = vmatpush.msra.mxu0 %v130
    %257 = vmatpush.msra.mxu0 %v129
    %258 = vmatpush.msra.mxu0 %v128
    %259 = vmatpush.msra.mxu0 %v127
    %260 = vmatpush.msra.mxu0 %v126
    %261 = vmatpush.msra.mxu0 %v125
    %262 = vmatpush.msra.mxu0 %v124
    %263 = vmatpush.msra.mxu0 %v123
    %264 = vmatpush.msra.mxu0 %v122
    %265 = vmatpush.msra.mxu0 %v121
    %266 = vmatpush.msra.mxu0 %v120
    %267 = vmatpush.msra.mxu0 %v119
    %268 = vmatpush.msra.mxu0 %v118
    %269 = vmatpush.msra.mxu0 %v117
    %270 = vmatpush.msra.mxu0 %v116
    %271 = vmatmul.f32.gmra.mxu0 %v85
    %v272 = vpop.f32.mrf.mxu0
    %v273 = vadd.f32 %v250, %v272
    %274 = vmatmul.f32.gmra.mxu0 %v93
    %v275 = vpop.f32.mrf.mxu0
    %v276 = vadd.f32 %v253, %v275
    %277 = vdwg.mxu0
    %278 = vmatpush.msra.mxu0 %v147
    %279 = vmatpush.msra.mxu0 %v146
    %280 = vmatpush.msra.mxu0 %v145
    %281 = vmatpush.msra.mxu0 %v144
    %282 = vmatpush.msra.mxu0 %v143
    %283 = vmatpush.msra.mxu0 %v142
    %284 = vmatpush.msra.mxu0 %v141
    %285 = vmatpush.msra.mxu0 %v140
    %286 = vmatpush.msra.mxu0 %v139
    %287 = vmatpush.msra.mxu0 %v138
    %288 = vmatpush.msra.mxu0 %v137
    %289 = vmatpush.msra.mxu0 %v136
    %290 = vmatpush.msra.mxu0 %v135
    %291 = vmatpush.msra.mxu0 %v134
    %292 = vmatpush.msra.mxu0 %v133
    %293 = vmatpush.msra.mxu0 %v132
    %294 = vmatmul.f32.gmra.mxu0 %v86
    %v295 = vpop.f32.mrf.mxu0
    %v296 = vadd.f32 %v273, %v295
    %297 = vmatmul.f32.gmra.mxu0 %v94
    %v298 = vpop.f32.mrf.mxu0
    %v299 = vadd.f32 %v276, %v298
    %300 = vdwg.mxu0
    %301 = vmatpush.msra.mxu0 %v163
    %302 = vmatpush.msra.mxu0 %v162
    %303 = vmatpush.msra.mxu0 %v161
    %304 = vmatpush.msra.mxu0 %v160
    %305 = vmatpush.msra.mxu0 %v159
    %306 = vmatpush.msra.mxu0 %v158
    %307 = vmatpush.msra.mxu0 %v157
    %308 = vmatpush.msra.mxu0 %v156
    %309 = vmatpush.msra.mxu0 %v155
    %310 = vmatpush.msra.mxu0 %v154
    %311 = vmatpush.msra.mxu0 %v153
    %312 = vmatpush.msra.mxu0 %v152
    %313 = vmatpush.msra.mxu0 %v151
    %314 = vmatpush.msra.mxu0 %v150
    %315 = vmatpush.msra.mxu0 %v149
    %316 = vmatpush.msra.mxu0 %v148
    %317 = vmatmul.f32.gmra.mxu0 %v87
    %v318 = vpop.f32.mrf.mxu0
    %v319 = vadd.f32 %v296, %v318
    %320 = vmatmul.f32.gmra.mxu0 %v95
    %v321 = vpop.f32.mrf.mxu0
    %v322 = vadd.f32 %v299, %v321
    %323 = vdwg.mxu0
    %324 = vmatpush.msra.mxu0 %v179
    %325 = vmatpush.msra.mxu0 %v178
    %326 = vmatpush.msra.mxu0 %v177
    %327 = vmatpush.msra.mxu0 %v176
    %328 = vmatpush.msra.mxu0 %v175
    %329 = vmatpush.msra.mxu0 %v174
    %330 = vmatpush.msra.mxu0 %v173
    %331 = vmatpush.msra.mxu0 %v172
    %332 = vmatpush.msra.mxu0 %v171
    %333 = vmatpush.msra.mxu0 %v170
    %334 = vmatpush.msra.mxu0 %v169
    %335 = vmatpush.msra.mxu0 %v168
    %336 = vmatpush.msra.mxu0 %v167
    %337 = vmatpush.msra.mxu0 %v166
    %338 = vmatpush.msra.mxu0 %v165
    %339 = vmatpush.msra.mxu0 %v164
    %340 = vmatmul.f32.gmra.mxu0 %v88
    %v341 = vpop.f32.mrf.mxu0
    %v342 = vadd.f32 %v319, %v341
    %343 = vmatmul.f32.gmra.mxu0 %v96
    %v344 = vpop.f32.mrf.mxu0
    %v345 = vadd.f32 %v322, %v344
    %346 = vdwg.mxu0
    %347 = vmatpush.msra.mxu0 %v195
    %348 = vmatpush.msra.mxu0 %v194
    %349 = vmatpush.msra.mxu0 %v193
    %350 = vmatpush.msra.mxu0 %v192
    %351 = vmatpush.msra.mxu0 %v191
    %352 = vmatpush.msra.mxu0 %v190
    %353 = vmatpush.msra.mxu0 %v189
    %354 = vmatpush.msra.mxu0 %v188
    %355 = vmatpush.msra.mxu0 %v187
    %356 = vmatpush.msra.mxu0 %v186
    %357 = vmatpush.msra.mxu0 %v185
    %358 = vmatpush.msra.mxu0 %v184
    %359 = vmatpush.msra.mxu0 %v183
    %360 = vmatpush.msra.mxu0 %v182
    %361 = vmatpush.msra.mxu0 %v181
    %362 = vmatpush.msra.mxu0 %v180
    %363 = vmatmul.f32.gmra.mxu0 %v89
    %v364 = vpop.f32.mrf.mxu0
    %v365 = vadd.f32 %v342, %v364
    %366 = vmatmul.f32.gmra.mxu0 %v97
    %v367 = vpop.f32.mrf.mxu0
    %v368 = vadd.f32 %v345, %v367
    %369 = vdwg.mxu0
    %370 = vmatpush.msra.mxu0 %v211
    %371 = vmatpush.msra.mxu0 %v210
    %372 = vmatpush.msra.mxu0 %v209
    %373 = vmatpush.msra.mxu0 %v208
    %374 = vmatpush.msra.mxu0 %v207
    %375 = vmatpush.msra.mxu0 %v206
    %376 = vmatpush.msra.mxu0 %v205
    %377 = vmatpush.msra.mxu0 %v204
    %378 = vmatpush.msra.mxu0 %v203
    %379 = vmatpush.msra.mxu0 %v202
    %380 = vmatpush.msra.mxu0 %v201
    %381 = vmatpush.msra.mxu0 %v200
    %382 = vmatpush.msra.mxu0 %v199
    %383 = vmatpush.msra.mxu0 %v198
    %384 = vmatpush.msra.mxu0 %v197
    %385 = vmatpush.msra.mxu0 %v196
    %386 = vmatmul.f32.gmra.mxu0 %v90
    %v387 = vpop.f32.mrf.mxu0
    %v388 = vadd.f32 %v365, %v387
    %389 = vmatmul.f32.gmra.mxu0 %v98
    %v390 = vpop.f32.mrf.mxu0
    %v391 = vadd.f32 %v368, %v390
    %392 = vdwg.mxu0
    %393 = vmatpush.msra.mxu0 %v227
    %394 = vmatpush.msra.mxu0 %v226
    %395 = vmatpush.msra.mxu0 %v225
    %396 = vmatpush.msra.mxu0 %v224
    %397 = vmatpush.msra.mxu0 %v223
    %398 = vmatpush.msra.mxu0 %v222
    %399 = vmatpush.msra.mxu0 %v221
    %400 = vmatpush.msra.mxu0 %v220
    %401 = vmatpush.msra.mxu0 %v219
    %402 = vmatpush.msra.mxu0 %v218
    %403 = vmatpush.msra.mxu0 %v217
    %404 = vmatpush.msra.mxu0 %v216
    %405 = vmatpush.msra.mxu0 %v215
    %406 = vmatpush.msra.mxu0 %v214
    %407 = vmatpush.msra.mxu0 %v213
    %408 = vmatpush.msra.mxu0 %v212
    %409 = vmatmul.f32.gmra.mxu0 %v91
    %v410 = vpop.f32.mrf.mxu0
    %v411 = vadd.f32 %v388, %v410
    %412 = vmatmul.f32.gmra.mxu0 %v99
    %v413 = vpop.f32.mrf.mxu0
    %v414 = vadd.f32 %v391, %v413
    %415 = vdwg.mxu0
    %v416 = vtanh.pop %v411
    %v417 = vtanh.pop %v414
    %v418 = vld [vmem:[%s3] sm:$0x1]
    %s419 = sld [smem:[#allocation5]]
    %v420 = vstv %s419
    %421 = vmatpush.xpose.msra.mxu0 0.0
    %422 = vmatpush.xpose.msra.mxu0 0.0
    %423 = vmatpush.xpose.msra.mxu0 0.0
    %424 = vmatpush.xpose.msra.mxu0 0.0
    %425 = vmatpush.xpose.msra.mxu0 0.0
    %426 = vmatpush.xpose.msra.mxu0 0.0
    %427 = vmatpush.xpose.msra.mxu0 0.0
    %428 = vmatpush.xpose.msra.mxu0 0.0
    %429 = vmatpush.xpose.msra.mxu0 0.0
    %430 = vmatpush.xpose.msra.mxu0 0.0
    %431 = vmatpush.xpose.msra.mxu0 0.0
    %432 = vmatpush.xpose.msra.mxu0 0.0
    %433 = vmatpush.xpose.msra.mxu0 0.0
    %434 = vmatpush.xpose.msra.mxu0 0.0
    %435 = vmatpush.xpose.msra.mxu0 %v417
    %436 = vmatpush.xpose.msra.mxu0 %v416
    %437 = vmatmul.f32.gmra.mxu0 %v418
    %v438 = vpop.f32.mrf.mxu0
    %v439 = vadd.f32 %v420, %v438
    %440 = vdwg.mxu0
    %v441 = vlaneseq
    %v442 = vand.u32 %v441, 127
    %v443 = vlaneseq
    %v444 = vshrl.u32 %v443, 7
    %v445 = vmul.u32 %v444, 8
    %vm446 = vcmp.ge.s32.totalorder %v442, %v445
    %v447 = vadd.s32 %v445, 8
    %vm448 = vcmp.lt.s32.totalorder %v442, %v447
    %vm449 = vmand %vm446, %vm448
    %v450 = vperm.slane %v439, 0
    %v451 = vsel %vm449, %v450, -inf
    %v452 = vld [vmem:[#allocation2] sm:$0x3]
    %vm453 = vcmask 123904
    %v454 = vsel %vm453, %v451, -inf
    %455 = vmax.xlane.f32.xlu0 %v454
    %v456 = vpop.xlane.xlu0 %455
    %v457 = vmax.f32 %v452, %v456
    %v458 = vsub.f32 %v452, %v457
    %v459 = vmul.f32 %v458, 1.442695
    %v460 = vpow.pop %v459
    %462 = vset.pattern.permute.xlu0 0
    %463 = vperm.xlu0 %462, %v457
    %v464 = vpop.permute.xlu0 %463
    %v466 = vsub.f32 %v451, %v464
    %v467 = vmul.f32 %v466, 1.442695
    %v468 = vpow.pop %v467
    %v469 = vld [vmem:[#allocation3] sm:$0x3]
    %v470 = vmul.f32 %v460, %v469
    %v471 = vsel %vm453, %v468, 0.0
    %472 = vadd.xlane.f32.xlu0 %v471
    %v473 = vpop.xlane.xlu0 %472
    %v474 = vadd.f32 %v470, %v473
    %vm475 = vcmask 1024
    %476 = vst.msk [vmem:[#allocation3] sm:$0x3] %vm475, %v474
    %vm477 = vcmask 130048
    %v479 = vsel %vm477, %v468, 0
    %481 = vmatpush.msra.mxu0 0.0
    %482 = vmatpush.msra.mxu0 0.0
    %483 = vmatpush.msra.mxu0 0.0
    %484 = vmatpush.msra.mxu0 0.0
    %485 = vmatpush.msra.mxu0 0.0
    %486 = vmatpush.msra.mxu0 0.0
    %487 = vmatpush.msra.mxu0 0.0
    %488 = vmatpush.msra.mxu0 0.0
    %489 = vmatpush.msra.mxu0 0.0
    %490 = vmatpush.msra.mxu0 0.0
    %491 = vmatpush.msra.mxu0 0.0
    %492 = vmatpush.msra.mxu0 0.0
    %493 = vmatpush.msra.mxu0 0.0
    %494 = vmatpush.msra.mxu0 0.0
    %495 = vmatpush.msra.mxu0 %v92
    %496 = vmatpush.msra.mxu0 %v84
    %497 = vmatmul.f32.gmra.mxu0 %v479
    %v498 = vpop.f32.mrf.mxu0
    %v499 = vadd.f32 0.0, %v498
    %500 = vdwg.mxu0
    %501 = vmatpush.msra.mxu0 0.0
    %502 = vmatpush.msra.mxu0 0.0
    %503 = vmatpush.msra.mxu0 0.0
    %504 = vmatpush.msra.mxu0 0.0
    %505 = vmatpush.msra.mxu0 0.0
    %506 = vmatpush.msra.mxu0 0.0
    %507 = vmatpush.msra.mxu0 0.0
    %508 = vmatpush.msra.mxu0 0.0
    %509 = vmatpush.msra.mxu0 0.0
    %510 = vmatpush.msra.mxu0 0.0
    %511 = vmatpush.msra.mxu0 0.0
    %512 = vmatpush.msra.mxu0 0.0
    %513 = vmatpush.msra.mxu0 0.0
    %514 = vmatpush.msra.mxu0 0.0
    %515 = vmatpush.msra.mxu0 %v93
    %516 = vmatpush.msra.mxu0 %v85
    %517 = vmatmul.f32.gmra.mxu0 %v479
    %v518 = vpop.f32.mrf.mxu0
    %v519 = vadd.f32 0.0, %v518
    %520 = vdwg.mxu0
    %521 = vmatpush.msra.mxu0 0.0
    %522 = vmatpush.msra.mxu0 0.0
    %523 = vmatpush.msra.mxu0 0.0
    %524 = vmatpush.msra.mxu0 0.0
    %525 = vmatpush.msra.mxu0 0.0
    %526 = vmatpush.msra.mxu0 0.0
    %527 = vmatpush.msra.mxu0 0.0
    %528 = vmatpush.msra.mxu0 0.0
    %529 = vmatpush.msra.mxu0 0.0
    %530 = vmatpush.msra.mxu0 0.0
    %531 = vmatpush.msra.mxu0 0.0
    %532 = vmatpush.msra.mxu0 0.0
    %533 = vmatpush.msra.mxu0 0.0
    %534 = vmatpush.msra.mxu0 0.0
    %535 = vmatpush.msra.mxu0 %v94
    %536 = vmatpush.msra.mxu0 %v86
    %537 = vmatmul.f32.gmra.mxu0 %v479
    %v538 = vpop.f32.mrf.mxu0
    %v539 = vadd.f32 0.0, %v538
    %540 = vdwg.mxu0
    %541 = vmatpush.msra.mxu0 0.0
    %542 = vmatpush.msra.mxu0 0.0
    %543 = vmatpush.msra.mxu0 0.0
    %544 = vmatpush.msra.mxu0 0.0
    %545 = vmatpush.msra.mxu0 0.0
    %546 = vmatpush.msra.mxu0 0.0
    %547 = vmatpush.msra.mxu0 0.0
    %548 = vmatpush.msra.mxu0 0.0
    %549 = vmatpush.msra.mxu0 0.0
    %550 = vmatpush.msra.mxu0 0.0
    %551 = vmatpush.msra.mxu0 0.0
    %552 = vmatpush.msra.mxu0 0.0
    %553 = vmatpush.msra.mxu0 0.0
    %554 = vmatpush.msra.mxu0 0.0
    %555 = vmatpush.msra.mxu0 %v95
    %556 = vmatpush.msra.mxu0 %v87
    %557 = vmatmul.f32.gmra.mxu0 %v479
    %v558 = vpop.f32.mrf.mxu0
    %v559 = vadd.f32 0.0, %v558
    %560 = vdwg.mxu0
    %561 = vmatpush.msra.mxu0 0.0
    %562 = vmatpush.msra.mxu0 0.0
    %563 = vmatpush.msra.mxu0 0.0
    %564 = vmatpush.msra.mxu0 0.0
    %565 = vmatpush.msra.mxu0 0.0
    %566 = vmatpush.msra.mxu0 0.0
    %567 = vmatpush.msra.mxu0 0.0
    %568 = vmatpush.msra.mxu0 0.0
    %569 = vmatpush.msra.mxu0 0.0
    %570 = vmatpush.msra.mxu0 0.0
    %571 = vmatpush.msra.mxu0 0.0
    %572 = vmatpush.msra.mxu0 0.0
    %573 = vmatpush.msra.mxu0 0.0
    %574 = vmatpush.msra.mxu0 0.0
    %575 = vmatpush.msra.mxu0 %v96
    %576 = vmatpush.msra.mxu0 %v88
    %577 = vmatmul.f32.gmra.mxu0 %v479
    %v578 = vpop.f32.mrf.mxu0
    %v579 = vadd.f32 0.0, %v578
    %580 = vdwg.mxu0
    %581 = vmatpush.msra.mxu0 0.0
    %582 = vmatpush.msra.mxu0 0.0
    %583 = vmatpush.msra.mxu0 0.0
    %584 = vmatpush.msra.mxu0 0.0
    %585 = vmatpush.msra.mxu0 0.0
    %586 = vmatpush.msra.mxu0 0.0
    %587 = vmatpush.msra.mxu0 0.0
    %588 = vmatpush.msra.mxu0 0.0
    %589 = vmatpush.msra.mxu0 0.0
    %590 = vmatpush.msra.mxu0 0.0
    %591 = vmatpush.msra.mxu0 0.0
    %592 = vmatpush.msra.mxu0 0.0
    %593 = vmatpush.msra.mxu0 0.0
    %594 = vmatpush.msra.mxu0 0.0
    %595 = vmatpush.msra.mxu0 %v97
    %596 = vmatpush.msra.mxu0 %v89
    %597 = vmatmul.f32.gmra.mxu0 %v479
    %v598 = vpop.f32.mrf.mxu0
    %v599 = vadd.f32 0.0, %v598
    %600 = vdwg.mxu0
    %601 = vmatpush.msra.mxu0 0.0
    %602 = vmatpush.msra.mxu0 0.0
    %603 = vmatpush.msra.mxu0 0.0
    %604 = vmatpush.msra.mxu0 0.0
    %605 = vmatpush.msra.mxu0 0.0
    %606 = vmatpush.msra.mxu0 0.0
    %607 = vmatpush.msra.mxu0 0.0
    %608 = vmatpush.msra.mxu0 0.0
    %609 = vmatpush.msra.mxu0 0.0
    %610 = vmatpush.msra.mxu0 0.0
    %611 = vmatpush.msra.mxu0 0.0
    %612 = vmatpush.msra.mxu0 0.0
    %613 = vmatpush.msra.mxu0 0.0
    %614 = vmatpush.msra.mxu0 0.0
    %615 = vmatpush.msra.mxu0 %v98
    %616 = vmatpush.msra.mxu0 %v90
    %617 = vmatmul.f32.gmra.mxu0 %v479
    %v618 = vpop.f32.mrf.mxu0
    %v619 = vadd.f32 0.0, %v618
    %620 = vdwg.mxu0
    %621 = vmatpush.msra.mxu0 0.0
    %622 = vmatpush.msra.mxu0 0.0
    %623 = vmatpush.msra.mxu0 0.0
    %624 = vmatpush.msra.mxu0 0.0
    %625 = vmatpush.msra.mxu0 0.0
    %626 = vmatpush.msra.mxu0 0.0
    %627 = vmatpush.msra.mxu0 0.0
    %628 = vmatpush.msra.mxu0 0.0
    %629 = vmatpush.msra.mxu0 0.0
    %630 = vmatpush.msra.mxu0 0.0
    %631 = vmatpush.msra.mxu0 0.0
    %632 = vmatpush.msra.mxu0 0.0
    %633 = vmatpush.msra.mxu0 0.0
    %634 = vmatpush.msra.mxu0 0.0
    %635 = vmatpush.msra.mxu0 %v99
    %636 = vmatpush.msra.mxu0 %v91
    %637 = vmatmul.f32.gmra.mxu0 %v479
    %v638 = vpop.f32.mrf.mxu0
    %v639 = vadd.f32 0.0, %v638
    %640 = vdwg.mxu0
    %v641 = vld [vmem:[#allocation4] sm:$0xff]
    %v642 = vld [vmem:[#allocation4 + $0x8] sm:$0xff]
    %644 = vset.pattern.permute.xlu0 0
    %645 = vperm.xlu0 %644, %v460
    %v646 = vpop.permute.xlu0 %645
    %650 = vst [vmem:[#allocation1] ss:$4 sm:$0xff] %v641
    %s651 = scalar_lea.vmem [#allocation1], 32
    %652 = vst [vmem:[%s651] ss:$4 sm:$0xff] %v642
    %v653 = vld.sshfl [vmem:[#allocation1] sm:$0xff pattern:$0x73625140]
    %v654 = vld.sshfl [vmem:[#allocation1 + $0x8] sm:$0xff pattern:$0x73625140]
    %v655 = vld.sshfl [vmem:[#allocation1 + $0x10] sm:$0xff pattern:$0x73625140]
    %v656 = vld.sshfl [vmem:[#allocation1 + $0x18] sm:$0xff pattern:$0x73625140]
    %v657 = vld.sshfl [vmem:[#allocation1 + $0x20] sm:$0xff pattern:$0x73625140]
    %v658 = vld.sshfl [vmem:[#allocation1 + $0x28] sm:$0xff pattern:$0x73625140]
    %v659 = vld.sshfl [vmem:[#allocation1 + $0x30] sm:$0xff pattern:$0x73625140]
    %v660 = vld.sshfl [vmem:[#allocation1 + $0x38] sm:$0xff pattern:$0x73625140]
    %v669 = vmul.f32 %v646, %v653
    %v670 = vmul.f32 %v646, %v654
    %v671 = vmul.f32 %v646, %v655
    %v672 = vmul.f32 %v646, %v656
    %v673 = vmul.f32 %v646, %v657
    %v674 = vmul.f32 %v646, %v658
    %v675 = vmul.f32 %v646, %v659
    %v676 = vmul.f32 %v646, %v660
    %v677 = vadd.f32 %v669, %v499
    %v678 = vadd.f32 %v670, %v519
    %v679 = vadd.f32 %v671, %v539
    %v680 = vadd.f32 %v672, %v559
    %v681 = vadd.f32 %v673, %v579
    %v682 = vadd.f32 %v674, %v599
    %v683 = vadd.f32 %v675, %v619
    %v684 = vadd.f32 %v676, %v639
    %v693 = vrot.slane %v678, 6
    %v694 = vrot.slane %v679, 4
    %v695 = vrot.slane %v680, 2
    %v696 = vrot.slane %v682, 6
    %v697 = vrot.slane %v683, 4
    %v698 = vrot.slane %v684, 2
    %vm699 = vcmask 1041408
    %v700 = vsel %vm699, %v677, %v693
    %vm701 = vcmask 1045508
    %v702 = vsel %vm701, %v694, %v695
    %vm703 = vcmask 1043456
    %v704 = vsel %vm703, %v700, %v702
    %v705 = vsel %vm699, %v681, %v696
    %v706 = vsel %vm701, %v697, %v698
    %v707 = vsel %vm703, %v705, %v706
    %710 = vst [vmem:[#allocation4] sm:$0xff] %v704
    %711 = vst [vmem:[#allocation4 + $0x8] sm:$0xff] %v707
    %712 = vst.msk [vmem:[#allocation2] sm:$0x3] %vm475, %v457
    // Predicated region
    $region46: #{tpu_custom_call.1} parent=1 // pred_check
      %p713 = pneg %p75
    $region47: #{tpu_custom_call.1} parent=1 // pred_check_branch
      %715 = sbr.rel (%p713) target = $region49
    $region48: #{tpu_custom_call.1} parent=1 // pred_region
      %v716 = vld [vmem:[#allocation4] sm:$0xff]
      %v717 = vld [vmem:[#allocation4 + $0x8] sm:$0xff]
      %v718 = vld [vmem:[#allocation3] sm:$0x3]
      %v719 = vrcp.pop %v718
      %v720 = vmul.f32 %v718, %v719
      %v721 = vsub.f32 1.0, %v720
      %v722 = vmul.f32 %v719, %v721
      %v723 = vadd.f32 %v719, %v722
      %vm724 = vweird.f32 %v718
      %vm725 = vweird.f32 %v719
      %vm726 = vmor %vm724, %vm725
      %v727 = vsel %vm726, %v719, %v723
      %v728 = vand.u32 2147483647, %v718
      %vm729 = vcmp.eq.f32.partialorder %v728, 8.507059e+37
      %v730 = vand.u32 %v718, 2147483648
      %v731 = vor.u32 1.1754944e-38, %v730
      %v732 = vsel %vm729, %v731, %v727
      %734 = vset.pattern.permute.xlu0 0
      %735 = vperm.xlu0 %734, %v732
      %v736 = vpop.permute.xlu0 %735
      %v738 = vunpack.c.l.s4 269488144
      %v739 = vunpack.c.0.s8 %v738
      %v740 = vperm.slane %v736, %v739
      %v742 = vmul.f32 %v716, %v740
      %v743 = vmul.f32 %v717, %v740
      %v744 = vld [vmem:[#allocation11] sm:$0xff]
      %v745 = vld [vmem:[#allocation11 + $0x8] sm:$0xff]
      %v746 = vld [vmem:[#allocation11 + $0x10] sm:$0xff]
      %v747 = vld [vmem:[#allocation11 + $0x18] sm:$0xff]
      %v748 = vld [vmem:[#allocation11 + $0x20] sm:$0xff]
      %v749 = vld [vmem:[#allocation11 + $0x28] sm:$0xff]
      %v750 = vld [vmem:[#allocation11 + $0x30] sm:$0xff]
      %v751 = vld [vmem:[#allocation11 + $0x38] sm:$0xff]
      %v752 = vld [vmem:[#allocation11 + $0x40] sm:$0xff]
      %v753 = vld [vmem:[#allocation11 + $0x48] sm:$0xff]
      %v754 = vld [vmem:[#allocation11 + $0x50] sm:$0xff]
      %v755 = vld [vmem:[#allocation11 + $0x58] sm:$0xff]
      %v756 = vld [vmem:[#allocation11 + $0x60] sm:$0xff]
      %v757 = vld [vmem:[#allocation11 + $0x68] sm:$0xff]
      %v758 = vld [vmem:[#allocation11 + $0x70] sm:$0xff]
      %v759 = vld [vmem:[#allocation11 + $0x78] sm:$0xff]
      %v760 = vld [vmem:[#allocation11 + $0x80] sm:$0xff]
      %v761 = vld [vmem:[#allocation11 + $0x88] sm:$0xff]
      %v762 = vld [vmem:[#allocation11 + $0x90] sm:$0xff]
      %v763 = vld [vmem:[#allocation11 + $0x98] sm:$0xff]
      %v764 = vld [vmem:[#allocation11 + $0xa0] sm:$0xff]
      %v765 = vld [vmem:[#allocation11 + $0xa8] sm:$0xff]
      %v766 = vld [vmem:[#allocation11 + $0xb0] sm:$0xff]
      %v767 = vld [vmem:[#allocation11 + $0xb8] sm:$0xff]
      %v768 = vld [vmem:[#allocation11 + $0xc0] sm:$0xff]
      %v769 = vld [vmem:[#allocation11 + $0xc8] sm:$0xff]
      %v770 = vld [vmem:[#allocation11 + $0xd0] sm:$0xff]
      %v771 = vld [vmem:[#allocation11 + $0xd8] sm:$0xff]
      %v772 = vld [vmem:[#allocation11 + $0xe0] sm:$0xff]
      %v773 = vld [vmem:[#allocation11 + $0xe8] sm:$0xff]
      %v774 = vld [vmem:[#allocation11 + $0xf0] sm:$0xff]
      %v775 = vld [vmem:[#allocation11 + $0xf8] sm:$0xff]
      %v776 = vld [vmem:[#allocation11 + $0x100] sm:$0xff]
      %v777 = vld [vmem:[#allocation11 + $0x108] sm:$0xff]
      %v778 = vld [vmem:[#allocation11 + $0x110] sm:$0xff]
      %v779 = vld [vmem:[#allocation11 + $0x118] sm:$0xff]
      %v780 = vld [vmem:[#allocation11 + $0x120] sm:$0xff]
      %v781 = vld [vmem:[#allocation11 + $0x128] sm:$0xff]
      %v782 = vld [vmem:[#allocation11 + $0x130] sm:$0xff]
      %v783 = vld [vmem:[#allocation11 + $0x138] sm:$0xff]
      %v784 = vld [vmem:[#allocation11 + $0x140] sm:$0xff]
      %v785 = vld [vmem:[#allocation11 + $0x148] sm:$0xff]
      %v786 = vld [vmem:[#allocation11 + $0x150] sm:$0xff]
      %v787 = vld [vmem:[#allocation11 + $0x158] sm:$0xff]
      %v788 = vld [vmem:[#allocation11 + $0x160] sm:$0xff]
      %v789 = vld [vmem:[#allocation11 + $0x168] sm:$0xff]
      %v790 = vld [vmem:[#allocation11 + $0x170] sm:$0xff]
      %v791 = vld [vmem:[#allocation11 + $0x178] sm:$0xff]
      %v792 = vld [vmem:[#allocation11 + $0x180] sm:$0xff]
      %v793 = vld [vmem:[#allocation11 + $0x188] sm:$0xff]
      %v794 = vld [vmem:[#allocation11 + $0x190] sm:$0xff]
      %v795 = vld [vmem:[#allocation11 + $0x198] sm:$0xff]
      %v796 = vld [vmem:[#allocation11 + $0x1a0] sm:$0xff]
      %v797 = vld [vmem:[#allocation11 + $0x1a8] sm:$0xff]
      %v798 = vld [vmem:[#allocation11 + $0x1b0] sm:$0xff]
      %v799 = vld [vmem:[#allocation11 + $0x1b8] sm:$0xff]
      %v800 = vld [vmem:[#allocation11 + $0x1c0] sm:$0xff]
      %v801 = vld [vmem:[#allocation11 + $0x1c8] sm:$0xff]
      %v802 = vld [vmem:[#allocation11 + $0x1d0] sm:$0xff]
      %v803 = vld [vmem:[#allocation11 + $0x1d8] sm:$0xff]
      %v804 = vld [vmem:[#allocation11 + $0x1e0] sm:$0xff]
      %v805 = vld [vmem:[#allocation11 + $0x1e8] sm:$0xff]
      %v806 = vld [vmem:[#allocation11 + $0x1f0] sm:$0xff]
      %v807 = vld [vmem:[#allocation11 + $0x1f8] sm:$0xff]
      %v808 = vld [vmem:[#allocation11 + $0x200] sm:$0xff]
      %v809 = vld [vmem:[#allocation11 + $0x208] sm:$0xff]
      %v810 = vld [vmem:[#allocation11 + $0x210] sm:$0xff]
      %v811 = vld [vmem:[#allocation11 + $0x218] sm:$0xff]
      %v812 = vld [vmem:[#allocation11 + $0x220] sm:$0xff]
      %v813 = vld [vmem:[#allocation11 + $0x228] sm:$0xff]
      %v814 = vld [vmem:[#allocation11 + $0x230] sm:$0xff]
      %v815 = vld [vmem:[#allocation11 + $0x238] sm:$0xff]
      %v816 = vld [vmem:[#allocation11 + $0x240] sm:$0xff]
      %v817 = vld [vmem:[#allocation11 + $0x248] sm:$0xff]
      %v818 = vld [vmem:[#allocation11 + $0x250] sm:$0xff]
      %v819 = vld [vmem:[#allocation11 + $0x258] sm:$0xff]
      %v820 = vld [vmem:[#allocation11 + $0x260] sm:$0xff]
      %v821 = vld [vmem:[#allocation11 + $0x268] sm:$0xff]
      %v822 = vld [vmem:[#allocation11 + $0x270] sm:$0xff]
      %v823 = vld [vmem:[#allocation11 + $0x278] sm:$0xff]
      %v824 = vld [vmem:[#allocation11 + $0x280] sm:$0xff]
      %v825 = vld [vmem:[#allocation11 + $0x288] sm:$0xff]
      %v826 = vld [vmem:[#allocation11 + $0x290] sm:$0xff]
      %v827 = vld [vmem:[#allocation11 + $0x298] sm:$0xff]
      %v828 = vld [vmem:[#allocation11 + $0x2a0] sm:$0xff]
      %v829 = vld [vmem:[#allocation11 + $0x2a8] sm:$0xff]
      %v830 = vld [vmem:[#allocation11 + $0x2b0] sm:$0xff]
      %v831 = vld [vmem:[#allocation11 + $0x2b8] sm:$0xff]
      %v832 = vld [vmem:[#allocation11 + $0x2c0] sm:$0xff]
      %v833 = vld [vmem:[#allocation11 + $0x2c8] sm:$0xff]
      %v834 = vld [vmem:[#allocation11 + $0x2d0] sm:$0xff]
      %v835 = vld [vmem:[#allocation11 + $0x2d8] sm:$0xff]
      %v836 = vld [vmem:[#allocation11 + $0x2e0] sm:$0xff]
      %v837 = vld [vmem:[#allocation11 + $0x2e8] sm:$0xff]
      %v838 = vld [vmem:[#allocation11 + $0x2f0] sm:$0xff]
      %v839 = vld [vmem:[#allocation11 + $0x2f8] sm:$0xff]
      %v840 = vld [vmem:[#allocation11 + $0x300] sm:$0xff]
      %v841 = vld [vmem:[#allocation11 + $0x308] sm:$0xff]
      %v842 = vld [vmem:[#allocation11 + $0x310] sm:$0xff]
      %v843 = vld [vmem:[#allocation11 + $0x318] sm:$0xff]
      %v844 = vld [vmem:[#allocation11 + $0x320] sm:$0xff]
      %v845 = vld [vmem:[#allocation11 + $0x328] sm:$0xff]
      %v846 = vld [vmem:[#allocation11 + $0x330] sm:$0xff]
      %v847 = vld [vmem:[#allocation11 + $0x338] sm:$0xff]
      %v848 = vld [vmem:[#allocation11 + $0x340] sm:$0xff]
      %v849 = vld [vmem:[#allocation11 + $0x348] sm:$0xff]
      %v850 = vld [vmem:[#allocation11 + $0x350] sm:$0xff]
      %v851 = vld [vmem:[#allocation11 + $0x358] sm:$0xff]
      %v852 = vld [vmem:[#allocation11 + $0x360] sm:$0xff]
      %v853 = vld [vmem:[#allocation11 + $0x368] sm:$0xff]
      %v854 = vld [vmem:[#allocation11 + $0x370] sm:$0xff]
      %v855 = vld [vmem:[#allocation11 + $0x378] sm:$0xff]
      %v856 = vld [vmem:[#allocation11 + $0x380] sm:$0xff]
      %v857 = vld [vmem:[#allocation11 + $0x388] sm:$0xff]
      %v858 = vld [vmem:[#allocation11 + $0x390] sm:$0xff]
      %v859 = vld [vmem:[#allocation11 + $0x398] sm:$0xff]
      %v860 = vld [vmem:[#allocation11 + $0x3a0] sm:$0xff]
      %v861 = vld [vmem:[#allocation11 + $0x3a8] sm:$0xff]
      %v862 = vld [vmem:[#allocation11 + $0x3b0] sm:$0xff]
      %v863 = vld [vmem:[#allocation11 + $0x3b8] sm:$0xff]
      %v864 = vld [vmem:[#allocation11 + $0x3c0] sm:$0xff]
      %v865 = vld [vmem:[#allocation11 + $0x3c8] sm:$0xff]
      %v866 = vld [vmem:[#allocation11 + $0x3d0] sm:$0xff]
      %v867 = vld [vmem:[#allocation11 + $0x3d8] sm:$0xff]
      %v868 = vld [vmem:[#allocation11 + $0x3e0] sm:$0xff]
      %v869 = vld [vmem:[#allocation11 + $0x3e8] sm:$0xff]
      %v870 = vld [vmem:[#allocation11 + $0x3f0] sm:$0xff]
      %v871 = vld [vmem:[#allocation11 + $0x3f8] sm:$0xff]
      %v872 = vld [vmem:[%s6] sm:$0x1]
      %v874 = vperm.slane %v872, 0
      %878 = vst [vmem:[#allocation1] ss:$4 sm:$0xff] %v742
      %s879 = scalar_lea.vmem [#allocation1], 32
      %880 = vst [vmem:[%s879] ss:$4 sm:$0xff] %v743
      %v881 = vld.sshfl [vmem:[#allocation1] sm:$0xff pattern:$0x73625140]
      %v882 = vld.sshfl [vmem:[#allocation1 + $0x8] sm:$0xff pattern:$0x73625140]
      %v883 = vld.sshfl [vmem:[#allocation1 + $0x10] sm:$0xff pattern:$0x73625140]
      %v884 = vld.sshfl [vmem:[#allocation1 + $0x18] sm:$0xff pattern:$0x73625140]
      %v885 = vld.sshfl [vmem:[#allocation1 + $0x20] sm:$0xff pattern:$0x73625140]
      %v886 = vld.sshfl [vmem:[#allocation1 + $0x28] sm:$0xff pattern:$0x73625140]
      %v887 = vld.sshfl [vmem:[#allocation1 + $0x30] sm:$0xff pattern:$0x73625140]
      %v888 = vld.sshfl [vmem:[#allocation1 + $0x38] sm:$0xff pattern:$0x73625140]
      %897 = vmatpush.msra.mxu0 %v759
      %898 = vmatpush.msra.mxu0 %v758
      %899 = vmatpush.msra.mxu0 %v757
      %900 = vmatpush.msra.mxu0 %v756
      %901 = vmatpush.msra.mxu0 %v755
      %902 = vmatpush.msra.mxu0 %v754
      %903 = vmatpush.msra.mxu0 %v753
      %904 = vmatpush.msra.mxu0 %v752
      %905 = vmatpush.msra.mxu0 %v751
      %906 = vmatpush.msra.mxu0 %v750
      %907 = vmatpush.msra.mxu0 %v749
      %908 = vmatpush.msra.mxu0 %v748
      %909 = vmatpush.msra.mxu0 %v747
      %910 = vmatpush.msra.mxu0 %v746
      %911 = vmatpush.msra.mxu0 %v745
      %912 = vmatpush.msra.mxu0 %v744
      %913 = vmatmul.f32.gmra.mxu0 %v881
      %v914 = vpop.f32.mrf.mxu0
      %v915 = vadd.f32 %v874, %v914
      %916 = vdwg.mxu0
      %917 = vmatpush.msra.mxu0 %v775
      %918 = vmatpush.msra.mxu0 %v774
      %919 = vmatpush.msra.mxu0 %v773
      %920 = vmatpush.msra.mxu0 %v772
      %921 = vmatpush.msra.mxu0 %v771
      %922 = vmatpush.msra.mxu0 %v770
      %923 = vmatpush.msra.mxu0 %v769
      %924 = vmatpush.msra.mxu0 %v768
      %925 = vmatpush.msra.mxu0 %v767
      %926 = vmatpush.msra.mxu0 %v766
      %927 = vmatpush.msra.mxu0 %v765
      %928 = vmatpush.msra.mxu0 %v764
      %929 = vmatpush.msra.mxu0 %v763
      %930 = vmatpush.msra.mxu0 %v762
      %931 = vmatpush.msra.mxu0 %v761
      %932 = vmatpush.msra.mxu0 %v760
      %933 = vmatmul.f32.gmra.mxu0 %v882
      %v934 = vpop.f32.mrf.mxu0
      %v935 = vadd.f32 %v915, %v934
      %936 = vdwg.mxu0
      %937 = vmatpush.msra.mxu0 %v791
      %938 = vmatpush.msra.mxu0 %v790
      %939 = vmatpush.msra.mxu0 %v789
      %940 = vmatpush.msra.mxu0 %v788
      %941 = vmatpush.msra.mxu0 %v787
      %942 = vmatpush.msra.mxu0 %v786
      %943 = vmatpush.msra.mxu0 %v785
      %944 = vmatpush.msra.mxu0 %v784
      %945 = vmatpush.msra.mxu0 %v783
      %946 = vmatpush.msra.mxu0 %v782
      %947 = vmatpush.msra.mxu0 %v781
      %948 = vmatpush.msra.mxu0 %v780
      %949 = vmatpush.msra.mxu0 %v779
      %950 = vmatpush.msra.mxu0 %v778
      %951 = vmatpush.msra.mxu0 %v777
      %952 = vmatpush.msra.mxu0 %v776
      %953 = vmatmul.f32.gmra.mxu0 %v883
      %v954 = vpop.f32.mrf.mxu0
      %v955 = vadd.f32 %v935, %v954
      %956 = vdwg.mxu0
      %957 = vmatpush.msra.mxu0 %v807
      %958 = vmatpush.msra.mxu0 %v806
      %959 = vmatpush.msra.mxu0 %v805
      %960 = vmatpush.msra.mxu0 %v804
      %961 = vmatpush.msra.mxu0 %v803
      %962 = vmatpush.msra.mxu0 %v802
      %963 = vmatpush.msra.mxu0 %v801
      %964 = vmatpush.msra.mxu0 %v800
      %965 = vmatpush.msra.mxu0 %v799
      %966 = vmatpush.msra.mxu0 %v798
      %967 = vmatpush.msra.mxu0 %v797
      %968 = vmatpush.msra.mxu0 %v796
      %969 = vmatpush.msra.mxu0 %v795
      %970 = vmatpush.msra.mxu0 %v794
      %971 = vmatpush.msra.mxu0 %v793
      %972 = vmatpush.msra.mxu0 %v792
      %973 = vmatmul.f32.gmra.mxu0 %v884
      %v974 = vpop.f32.mrf.mxu0
      %v975 = vadd.f32 %v955, %v974
      %976 = vdwg.mxu0
      %977 = vmatpush.msra.mxu0 %v823
      %978 = vmatpush.msra.mxu0 %v822
      %979 = vmatpush.msra.mxu0 %v821
      %980 = vmatpush.msra.mxu0 %v820
      %981 = vmatpush.msra.mxu0 %v819
      %982 = vmatpush.msra.mxu0 %v818
      %983 = vmatpush.msra.mxu0 %v817
      %984 = vmatpush.msra.mxu0 %v816
      %985 = vmatpush.msra.mxu0 %v815
      %986 = vmatpush.msra.mxu0 %v814
      %987 = vmatpush.msra.mxu0 %v813
      %988 = vmatpush.msra.mxu0 %v812
      %989 = vmatpush.msra.mxu0 %v811
      %990 = vmatpush.msra.mxu0 %v810
      %991 = vmatpush.msra.mxu0 %v809
      %992 = vmatpush.msra.mxu0 %v808
      %993 = vmatmul.f32.gmra.mxu0 %v885
      %v994 = vpop.f32.mrf.mxu0
      %v995 = vadd.f32 %v975, %v994
      %996 = vdwg.mxu0
      %997 = vmatpush.msra.mxu0 %v839
      %998 = vmatpush.msra.mxu0 %v838
      %999 = vmatpush.msra.mxu0 %v837
      %1000 = vmatpush.msra.mxu0 %v836
      %1001 = vmatpush.msra.mxu0 %v835
      %1002 = vmatpush.msra.mxu0 %v834
      %1003 = vmatpush.msra.mxu0 %v833
      %1004 = vmatpush.msra.mxu0 %v832
      %1005 = vmatpush.msra.mxu0 %v831
      %1006 = vmatpush.msra.mxu0 %v830
      %1007 = vmatpush.msra.mxu0 %v829
      %1008 = vmatpush.msra.mxu0 %v828
      %1009 = vmatpush.msra.mxu0 %v827
      %1010 = vmatpush.msra.mxu0 %v826
      %1011 = vmatpush.msra.mxu0 %v825
      %1012 = vmatpush.msra.mxu0 %v824
      %1013 = vmatmul.f32.gmra.mxu0 %v886
      %v1014 = vpop.f32.mrf.mxu0
      %v1015 = vadd.f32 %v995, %v1014
      %1016 = vdwg.mxu0
      %1017 = vmatpush.msra.mxu0 %v855
      %1018 = vmatpush.msra.mxu0 %v854
      %1019 = vmatpush.msra.mxu0 %v853
      %1020 = vmatpush.msra.mxu0 %v852
      %1021 = vmatpush.msra.mxu0 %v851
      %1022 = vmatpush.msra.mxu0 %v850
      %1023 = vmatpush.msra.mxu0 %v849
      %1024 = vmatpush.msra.mxu0 %v848
      %1025 = vmatpush.msra.mxu0 %v847
      %1026 = vmatpush.msra.mxu0 %v846
      %1027 = vmatpush.msra.mxu0 %v845
      %1028 = vmatpush.msra.mxu0 %v844
      %1029 = vmatpush.msra.mxu0 %v843
      %1030 = vmatpush.msra.mxu0 %v842
      %1031 = vmatpush.msra.mxu0 %v841
      %1032 = vmatpush.msra.mxu0 %v840
      %1033 = vmatmul.f32.gmra.mxu0 %v887
      %v1034 = vpop.f32.mrf.mxu0
      %v1035 = vadd.f32 %v1015, %v1034
      %1036 = vdwg.mxu0
      %1037 = vmatpush.msra.mxu0 %v871
      %1038 = vmatpush.msra.mxu0 %v870
      %1039 = vmatpush.msra.mxu0 %v869
      %1040 = vmatpush.msra.mxu0 %v868
      %1041 = vmatpush.msra.mxu0 %v867
      %1042 = vmatpush.msra.mxu0 %v866
      %1043 = vmatpush.msra.mxu0 %v865
      %1044 = vmatpush.msra.mxu0 %v864
      %1045 = vmatpush.msra.mxu0 %v863
      %1046 = vmatpush.msra.mxu0 %v862
      %1047 = vmatpush.msra.mxu0 %v861
      %1048 = vmatpush.msra.mxu0 %v860
      %1049 = vmatpush.msra.mxu0 %v859
      %1050 = vmatpush.msra.mxu0 %v858
      %1051 = vmatpush.msra.mxu0 %v857
      %1052 = vmatpush.msra.mxu0 %v856
      %1053 = vmatmul.f32.gmra.mxu0 %v888
      %v1054 = vpop.f32.mrf.mxu0
      %v1055 = vadd.f32 %v1035, %v1054
      %1056 = vdwg.mxu0
      %1057 = vst [vmem:[#allocation12] sm:$0x3] %v1055
    $region49: #{tpu_custom_call.1} parent=1 // pred_fallthru
      _
    // Predicated region
    $region50: #{tpu_custom_call.1} parent=1 // pred_check
      _
    $region51: #{tpu_custom_call.1} parent=1 // pred_check_branch
      %1059 = sbr.rel (0) target = $region53
    $region52: #{tpu_custom_call.1} parent=1 // pred_region
      %1061 = vsyncadd [#allocation8], 0
      %s1063 = sshll.u32 [#allocation12], 4
      %s1064 = int_to_ptr.vmem [resolvable:$true] %s1063
      %s1065 = sshll.u32 %s7, 4
      %s1066 = int_to_ptr.hbm [resolvable:$true] %s1065
      %1068 = dma.vmem_to_hbm [thread:$0]  %s1064, 32, %s1066, [#allocation8]
    $region53: #{tpu_custom_call.1} parent=1 // pred_fallthru
      _
    // Predicated region
    $region54: #{tpu_custom_call.1} parent=1 // pred_check
      _
    $region55: #{tpu_custom_call.1} parent=1 // pred_check_branch
      %1070 = sbr.rel (0) target = $region57
    $region56: #{tpu_custom_call.1} parent=1 // pred_region
      %1072 = dma.done [#allocation8], 32
    $region57: #{tpu_custom_call.1} parent=1 // pred_fallthru
      _
    %1073 = vsyncpa [#allocation7], 1
    %1074 = vsyncpa [#allocation10], 1
    %1075 = vsyncpa [#allocation8], 1

</llo_original>
